<compile_context>
chip_gen: v5e
topology: v5e:2x2
jax: 0.10.0
libtpu: 0.0.40
codegen_flags: <defaults>
</compile_context>

<pallas_src>
import math
import numpy as np
import jax
import jax.numpy as jnp
from jax.experimental import pallas as pl
from jax.experimental.pallas import tpu as pltpu

LRELU_SLOPE = 0.01   # torch.nn.LeakyReLU default
BN_EPS = 1e-5        # torch.nn.BatchNorm1d default
LW = 128             # lane width: every fused layer / parameter row is padded to this


def _ceil(a, b):
    return (a + b - 1) // b * b


# ----------------------------- parameter init ---------------------------------

def _init_linear(key, din, dout):
    kw, kb = jax.random.split(key)
    bound = 1.0 / math.sqrt(din)   # matches nn.Linear default init range
    w = jax.random.uniform(kw, (din, dout), jnp.float32, -bound, bound)
    b = jax.random.uniform(kb, (dout,), jnp.float32, -bound, bound)
    return w, b


def init_mlp(key, dim_in, dim_out, nbase, decoder=False):
    layers = [1, 2, 4]
    if decoder:
        layers = layers[::-1]
    dims = [dim_in, nbase // layers[0], nbase // layers[1], nbase // layers[2], dim_out]
    k = jax.random.split(key, 4)
    w1, b1 = _init_linear(k[0], dims[0], dims[1])
    w2, b2 = _init_linear(k[1], dims[1], dims[2])
    w3, b3 = _init_linear(k[2], dims[2], dims[3])
    wo, bo = _init_linear(k[3], dims[3], dims[4])
    ones = lambda d: jnp.ones((d,), jnp.float32)
    zeros = lambda d: jnp.zeros((d,), jnp.float32)
    return dict(w1=w1, b1=b1, g1=ones(dims[1]), bt1=zeros(dims[1]),
                w2=w2, b2=b2, g2=ones(dims[2]), bt2=zeros(dims[2]),
                w3=w3, b3=b3, g3=ones(dims[3]), bt3=zeros(dims[3]),
                wo=wo, bo=bo, dims=dims)


def init_generator(key, *, dimrna, dimtcr, dimz, dim_state_embedding, nbase):
    # NOTE: mlp_patient_embeddings_{rna,tcr} and the registered embedding-matrix
    # buffers are not used in Generator.forward(), so they are omitted here.
    e3 = 3 * dim_state_embedding
    k = jax.random.split(key, 4)
    return {
        "enc_rna": init_mlp(k[0], dimrna + e3, dimz * 2, nbase),
        "enc_tcr": init_mlp(k[1], dimtcr + e3, dimz * 2, nbase),
        "dec_rna": init_mlp(k[2], dimz + e3, dimrna, nbase, decoder=True),
        "dec_tcr": init_mlp(k[3], dimz + e3, dimtcr, nbase, decoder=True),
        "dimz": dimz,
    }


def make_cfg(dimrna, dimtcr, dim_state_embedding, dimz, nbase):
    e3 = 3 * dim_state_embedding
    used = dimrna + dimtcr + e3 + dimz
    cfg = dict(dimrna=dimrna, dimtcr=dimtcr, E3=e3, dimz=dimz, nbase=nbase,
               LW=LW, Lin=_ceil(used, LW), used=used,
               e_off=dimrna + dimtcr, eps_off=dimrna + dimtcr + e3)
    # The lane-fused design keeps every fused layer width inside one 128-lane block.
    # TODO(synk): for nbase > 64 (real model uses 2048) the hidden dims would need
    # N/K tiling (grid over feature blocks) instead of single-vreg-width fusion.
    assert 2 * nbase <= LW, "nbase too large for single-lane-block rna/tcr fusion"
    assert 4 * dimz <= LW and dimrna + dimtcr <= LW
    return cfg


# --------------------------- parameter slab packing ---------------------------

def pack_params(params, cfg):
    lw, lin = cfg["LW"], cfg["Lin"]
    dimrna, dimtcr, dimz, e3 = cfg["dimrna"], cfg["dimtcr"], cfg["dimz"], cfg["E3"]
    e_off = cfg["e_off"]
    er, et = params["enc_rna"], params["enc_tcr"]
    dr, dt = params["dec_rna"], params["dec_tcr"]
    A = lambda x: np.asarray(x, np.float32)
    d1 = er["dims"][1]    # encoder first hidden width  (= nbase)
    dd1 = dt["dims"][1]   # decoder first hidden width  (= nbase // 4)

    blocks, offs = [], {}
    nrows = 0

    def add(name, mat):
        nonlocal nrows
        r, c = mat.shape
        rp = _ceil(r, 8)
        blk = np.zeros((rp, lw), np.float32)
        blk[:r, :c] = mat
        offs[name] = nrows
        blocks.append(blk)
        nrows += rp

    def block_diag(a, b):
        a, b = A(a), A(b)
        m = np.zeros((lw, lw), np.float32)
        m[:a.shape[0], :a.shape[1]] = a
        m[a.shape[0]:a.shape[0] + b.shape[0], a.shape[1]:a.shape[1] + b.shape[1]] = b
        return m

    # --- fused encoder weights; hidden lane layout = [rna | tcr | 0-pad] ---
    w1e = np.zeros((lin, lw), np.float32)                      # data-slab rows -> h1
    w1e[0:dimrna, 0:d1] = A(er["w1"])[0:dimrna]                # x_rna rows
    w1e[dimrna:e_off, d1:2 * d1] = A(et["w1"])[0:dimtcr]       # x_tcr rows
    w1e[e_off:e_off + e3, 0:d1] = A(er["w1"])[dimrna:]         # e_cat rows -> rna half
    w1e[e_off:e_off + e3, d1:2 * d1] = A(et["w1"])[dimtcr:]    # e_cat rows -> tcr half
    add("w1e", w1e)
    add("w2e", block_diag(er["w2"], et["w2"]))
    add("w3e", block_diag(er["w3"], et["w3"]))
    add("woe", block_diag(er["wo"], et["wo"]))                 # -> [z_rna | z_tcr | 0]

    # --- fused decoder weights; hidden lane layout = [tcr | rna | 0-pad] ---
    w1dz = np.zeros((dimz, lw), np.float32)                    # z rows (split-K term 1)
    w1dz[:, 0:dd1] = A(dt["w1"])[0:dimz]
    w1dz[:, dd1:2 * dd1] = A(dr["w1"])[0:dimz]
    add("w1dz", w1dz)
    w1de = np.zeros((lin, lw), np.float32)                     # e_cat rows (split-K term 2)
    w1de[e_off:e_off + e3, 0:dd1] = A(dt["w1"])[dimz:]
    w1de[e_off:e_off + e3, dd1:2 * dd1] = A(dr["w1"])[dimz:]
    add("w1de", w1de)
    add("w2d", block_diag(dt["w2"], dr["w2"]))
    add("w3d", block_diag(dt["w3"], dr["w3"]))
    add("wod", block_diag(dt["wo"], dr["wo"]))                 # -> [recon_tcr | recon_rna | 0]

    # --- bias / BN vectors: one 128-lane slab row each, [branch0 | branch1 | 0-pad] ---
    def fvec(a, b):
        a, b = A(a), A(b)
        v = np.zeros((1, lw), np.float32)
        v[0, :a.shape[0]] = a
        v[0, a.shape[0]:a.shape[0] + b.shape[0]] = b
        return v

    vec_rows, vec_names = [], []
    for pref, (pa, pb) in (("e_", (er, et)), ("d_", (dt, dr))):
        for nm in ("b1", "g1", "bt1", "b2", "g2", "bt2", "b3", "g3", "bt3", "bo"):
            vec_names.append(pref + nm)
            vec_rows.append(fvec(pa[nm], pb[nm]))
    voff = nrows
    add("_vecs", np.concatenate(vec_rows, axis=0))
    for i, nm in enumerate(vec_names):
        offs[nm] = voff + i

    return jnp.asarray(np.concatenate(blocks, axis=0)), offs


# --------------------------------- kernel -------------------------------------

def make_kernel(cfg, offs):
    lw, lin, dimz, eps_off = cfg["LW"], cfg["Lin"], cfg["dimz"], cfg["eps_off"]

    def kernel(data_ref, p_ref, out_ref):
        data = data_ref[...]                                   # (B, Lin) lane-dense slab

        def w(name, rows):                                     # static slab view -> load
            o = offs[name]
            return p_ref[o:o + rows, :]

        def v(name):                                           # (1, LW) parameter row
            o = offs[name]
            return p_ref[o:o + 1, :]

        def dot(a, b):
            return jnp.dot(a, b, preferred_element_type=jnp.float32)

        def bn_lrelu(y, g, b):
            # Training-mode BatchNorm1d, single-pass batch stats (biased variance).
            inv_n = 1.0 / y.shape[0]
            mean = jnp.sum(y, axis=0, keepdims=True) * inv_n
            ex2 = jnp.sum(y * y, axis=0, keepdims=True) * inv_n
            var = jnp.maximum(ex2 - mean * mean, 0.0)
            yn = v(g) * ((y - mean) * jax.lax.rsqrt(var + BN_EPS)) + v(b)
            return jnp.where(yn > 0, yn, LRELU_SLOPE * yn)

        # --- fused encoders (rna|tcr along lanes); torch.cat folded into w1e rows ---
        h = bn_lrelu(dot(data, w("w1e", lin)) + v("e_b1"), "e_g1", "e_bt1")
        h = bn_lrelu(dot(h, w("w2e", lw)) + v("e_b2"), "e_g2", "e_bt2")
        h = bn_lrelu(dot(h, w("w3e", lw)) + v("e_b3"), "e_g3", "e_bt3")
        z_fused = dot(h, w("woe", lw)) + v("e_bo")             # [z_rna | z_tcr | 0]

        # --- mu / logvar / reparameterization ---
        mulv = 0.5 * (z_fused[:, 0:2 * dimz] + z_fused[:, 2 * dimz:4 * dimz])  # [mu | logvar]
        mu = mulv[:, 0:dimz]
        logvar = mulv[:, dimz:2 * dimz]
        eps = data[:, eps_off:eps_off + dimz]
        z = eps * jnp.exp(0.5 * logvar) + mu                   # (B, dimz)

        # --- fused decoders (tcr|rna along lanes); shared = cat([z]+emb) via split-K ---
        h = bn_lrelu(dot(z, w("w1dz", dimz)) + dot(data, w("w1de", lin)) + v("d_b1"),
                     "d_g1", "d_bt1")
        h = bn_lrelu(dot(h, w("w2d", lw)) + v("d_b2"), "d_g2", "d_bt2")
        h = bn_lrelu(dot(h, w("w3d", lw)) + v("d_b3"), "d_g3", "d_bt3")
        dec_out = dot(h, w("wod", lw)) + v("d_bo")             # [recon_tcr | recon_rna | 0]

        # --- single lane-dense packed output slab (B, 3*LW), three full-width stores ---
        out_ref[:, 0:lw] = z_fused
        out_ref[:, lw:2 * lw] = dec_out
        pad = jnp.zeros((mulv.shape[0], lw - 2 * dimz), jnp.float32)
        out_ref[:, 2 * lw:3 * lw] = jnp.concatenate([mulv, pad], axis=-1)
        # TODO(synk): on v7x the independent rna/tcr branch pairs could be split across
        # the two TensorCores via pl.core_map once per-branch compute grows; at these
        # tiny shapes the cross-core sync would dominate, so it is intentionally skipped.

    return kernel


# ------------------------------ forward wrapper --------------------------------

def make_generator_forward(cfg, offs):
    kernel = make_kernel(cfg, offs)
    lw, lin, used = cfg["LW"], cfg["Lin"], cfg["used"]
    dimrna, dimtcr, dimz = cfg["dimrna"], cfg["dimtcr"], cfg["dimz"]
    vmem = pl.BlockSpec(memory_space=pltpu.MemorySpace.VMEM)

    @jax.jit
    def forward(param_slab, x_rna, x_tcr, e0, e1, e2, eps):
        b = x_rna.shape[0]
        # One lane-dense input slab: [x_rna | x_tcr | e0 | e1 | e2 | eps | 0-pad].
        data = jnp.concatenate([x_rna, x_tcr, e0, e1, e2, eps], axis=-1)
        data = jnp.pad(data, ((0, 0), (0, lin - used)))
        out = pl.pallas_call(
            kernel,
            out_shape=jax.ShapeDtypeStruct((b, 3 * lw), jnp.float32),
            in_specs=[vmem, vmem],
            out_specs=vmem,
        )(data, param_slab)
        # Unpack the packed output slab (wrapper-side slicing, lane-dense writeback).
        z_rna = out[:, 0:2 * dimz]
        z_tcr = out[:, 2 * dimz:4 * dimz]
        recon_tcr = out[:, lw:lw + dimtcr]
        recon_rna = out[:, lw + dimtcr:lw + dimtcr + dimrna]
        mu = out[:, 2 * lw:2 * lw + dimz]
        logvar = out[:, 2 * lw + dimz:2 * lw + 2 * dimz]
        return recon_rna, recon_tcr, (mu, logvar, (z_rna, z_tcr))

    return forward


# ------------------------------ pure-JAX reference -----------------------------

def reference_forward(params, x_rna, x_tcr, embeddings, eps):
    hi = jax.lax.Precision.HIGHEST
    e_cat = jnp.concatenate(embeddings, axis=-1)

    def mlp(p, x):
        def lin(w, b, h):
            return jnp.dot(h, w, precision=hi) + b

        def bn(h, g, bt):
            m = jnp.mean(h, axis=0, keepdims=True)
            var = jnp.mean((h - m) ** 2, axis=0, keepdims=True)
            return g * (h - m) / jnp.sqrt(var + BN_EPS) + bt

        act = lambda h: jnp.where(h > 0, h, LRELU_SLOPE * h)
        h = act(bn(lin(p["w1"], p["b1"], x), p["g1"], p["bt1"]))
        h = act(bn(lin(p["w2"], p["b2"], h), p["g2"], p["bt2"]))
        h = act(bn(lin(p["w3"], p["b3"], h), p["g3"], p["bt3"]))
        return lin(p["wo"], p["bo"], h)

    z_rna = mlp(params["enc_rna"], jnp.concatenate([x_rna, e_cat], axis=-1))
    z_tcr = mlp(params["enc_tcr"], jnp.concatenate([x_tcr, e_cat], axis=-1))
    dimz = params["dimz"]
    mu = 0.5 * (z_rna[:, :dimz] + z_tcr[:, :dimz])
    logvar = 0.5 * (z_rna[:, dimz:] + z_tcr[:, dimz:])
    z = eps * jnp.exp(0.5 * logvar) + mu
    shared = jnp.concatenate([z, e_cat], axis=-1)
    recon_tcr = mlp(params["dec_tcr"], shared)
    recon_rna = mlp(params["dec_rna"], shared)
    return recon_rna, recon_tcr, (mu, logvar, (z_rna, z_tcr))


# ----------------------------------- main ---------------------------------------

if __name__ == "__main__":
    B = 128                      # fills vreg sublanes; MXU M-dim nearly free up to here+
    dimrna, dimtcr = 32, 24
    dim_state_embedding = 16
    dimz = 16
    nbase = 64                   # n_channels_base (kept small: 2*nbase fits one lane block)

    root = jax.random.PRNGKey(0)
    k_par, k_xr, k_xt, k_e0, k_e1, k_e2, k_eps = jax.random.split(root, 7)

    params = init_generator(k_par, dimrna=dimrna, dimtcr=dimtcr, dimz=dimz,
                            dim_state_embedding=dim_state_embedding, nbase=nbase)
    cfg = make_cfg(dimrna, dimtcr, dim_state_embedding, dimz, nbase)
    param_slab, offs = pack_params(params, cfg)
    forward = make_generator_forward(cfg, offs)

    x_rna = jax.random.normal(k_xr, (B, dimrna), jnp.float32)
    x_tcr = jax.random.normal(k_xt, (B, dimtcr), jnp.float32)
    e0 = jax.random.normal(k_e0, (B, dim_state_embedding), jnp.float32)
    e1 = jax.random.normal(k_e1, (B, dim_state_embedding), jnp.float32)
    e2 = jax.random.normal(k_e2, (B, dim_state_embedding), jnp.float32)
    eps = jax.random.normal(k_eps, (B, dimz), jnp.float32)   # N(0,1) reparam noise (passed in)

    recon_rna, recon_tcr, (mu, logvar, (z_rna, z_tcr)) = forward(
        param_slab, x_rna, x_tcr, e0, e1, e2, eps)
    jax.block_until_ready((recon_rna, recon_tcr, mu, logvar, z_rna, z_tcr))

    # Shape checks.
    assert recon_rna.shape == (B, dimrna) and recon_tcr.shape == (B, dimtcr)
    assert mu.shape == (B, dimz) and logvar.shape == (B, dimz)
    assert z_rna.shape == (B, 2 * dimz) and z_tcr.shape == (B, 2 * dimz)

    # Numeric check against the pure-JAX reference of the unfused module.
    ref = reference_forward(params, x_rna, x_tcr, [e0, e1, e2], eps)
    ref_flat = (ref[0], ref[1], ref[2][0], ref[2][1], ref[2][2][0], ref[2][2][1])
    got_flat = (recon_rna, recon_tcr, mu, logvar, z_rna, z_tcr)
    names = ("recon_rna", "recon_tcr", "mu", "logvar", "z_rna", "z_tcr")
    for nm, a, r in zip(names, got_flat, ref_flat):
        assert bool(jnp.all(jnp.isfinite(a))), f"{nm} has non-finite values"
        err = float(jnp.max(jnp.abs(a - r)))
        assert err < 5e-3, f"{nm} mismatch vs reference: max abs err {err}"

    print("KERNEL_OK")
</pallas_src>

<mosaic_0001>
module attributes {stable_mosaic.version = 11 : i64} {
  func.func @kernel(%arg0: memref<128x128xf32, #tpu.memory_space<vmem>>, %arg1: memref<1064x128xf32, #tpu.memory_space<vmem>>, %arg2: memref<128x384xf32, #tpu.memory_space<vmem>>) attributes {dimension_semantics = [], scalar_prefetch = 0 : i64, scratch_operands = 0 : i64, tpu.core_type = #tpu.core_type<tc>} {
    %c0 = arith.constant 0 : index
    %c0_0 = arith.constant 0 : index
    %0 = vector.load %arg0[%c0, %c0_0] : memref<128x128xf32, #tpu.memory_space<vmem>>, vector<128x128xf32>
    %c0_1 = arith.constant 0 : index
    %c0_2 = arith.constant 0 : index
    %1 = vector.load %arg1[%c0_1, %c0_2] : memref<1064x128xf32, #tpu.memory_space<vmem>>, vector<128x128xf32>
    %cst = arith.constant dense<0.000000e+00> : vector<128x128xf32>
    %2 = tpu.matmul %0, %1, %cst {dimension_numbers = #tpu.dot_dimension_numbers<[1], [0], [0], [1], [0, 0, 1, 1], [], []>} : vector<128x128xf32>, vector<128x128xf32>, vector<128x128xf32> -> vector<128x128xf32>
    %c1040 = arith.constant 1040 : index
    %c0_3 = arith.constant 0 : index
    %3 = vector.load %arg1[%c1040, %c0_3] : memref<1064x128xf32, #tpu.memory_space<vmem>>, vector<1x128xf32>
    %4 = vector.broadcast %3 : vector<1x128xf32> to vector<128x128xf32>
    %5 = arith.addf %2, %4 : vector<128x128xf32>
    %cst_4 = arith.constant dense<0.000000e+00> : vector<128xf32>
    %6 = vector.multi_reduction <add>, %5, %cst_4 [0] : vector<128x128xf32> to vector<128xf32>
    %7 = vector.shape_cast %6 : vector<128xf32> to vector<1x128xf32>
    %cst_5 = arith.constant 7.812500e-03 : f32
    %8 = vector.broadcast %cst_5 : f32 to vector<1x128xf32>
    %9 = arith.mulf %7, %8 : vector<1x128xf32>
    %10 = arith.mulf %5, %5 : vector<128x128xf32>
    %cst_6 = arith.constant dense<0.000000e+00> : vector<128xf32>
    %11 = vector.multi_reduction <add>, %10, %cst_6 [0] : vector<128x128xf32> to vector<128xf32>
    %12 = vector.shape_cast %11 : vector<128xf32> to vector<1x128xf32>
    %cst_7 = arith.constant 7.812500e-03 : f32
    %13 = vector.broadcast %cst_7 : f32 to vector<1x128xf32>
    %14 = arith.mulf %12, %13 : vector<1x128xf32>
    %15 = arith.mulf %9, %9 : vector<1x128xf32>
    %16 = arith.subf %14, %15 : vector<1x128xf32>
    %cst_8 = arith.constant 0.000000e+00 : f32
    %17 = vector.broadcast %cst_8 : f32 to vector<1x128xf32>
    %18 = arith.maximumf %16, %17 : vector<1x128xf32>
    %c1041 = arith.constant 1041 : index
    %c0_9 = arith.constant 0 : index
    %19 = vector.load %arg1[%c1041, %c0_9] : memref<1064x128xf32, #tpu.memory_space<vmem>>, vector<1x128xf32>
    %20 = vector.broadcast %9 : vector<1x128xf32> to vector<128x128xf32>
    %21 = arith.subf %5, %20 : vector<128x128xf32>
    %cst_10 = arith.constant 9.99999974E-6 : f32
    %22 = vector.broadcast %cst_10 : f32 to vector<1x128xf32>
    %23 = arith.addf %18, %22 : vector<1x128xf32>
    %24 = math.rsqrt %23 : vector<1x128xf32>
    %25 = vector.broadcast %24 : vector<1x128xf32> to vector<128x128xf32>
    %26 = arith.mulf %21, %25 : vector<128x128xf32>
    %27 = vector.broadcast %19 : vector<1x128xf32> to vector<128x128xf32>
    %28 = arith.mulf %27, %26 : vector<128x128xf32>
    %c1042 = arith.constant 1042 : index
    %c0_11 = arith.constant 0 : index
    %29 = vector.load %arg1[%c1042, %c0_11] : memref<1064x128xf32, #tpu.memory_space<vmem>>, vector<1x128xf32>
    %30 = vector.broadcast %29 : vector<1x128xf32> to vector<128x128xf32>
    %31 = arith.addf %28, %30 : vector<128x128xf32>
    %cst_12 = arith.constant 0.000000e+00 : f32
    %32 = vector.broadcast %cst_12 : f32 to vector<128x128xf32>
    %33 = arith.cmpf ogt, %31, %32 : vector<128x128xf32>
    %cst_13 = arith.constant 0.00999999977 : f32
    %34 = vector.broadcast %cst_13 : f32 to vector<128x128xf32>
    %35 = arith.mulf %34, %31 : vector<128x128xf32>
    %36 = arith.select %33, %31, %35 : vector<128x128xi1>, vector<128x128xf32>
    %c128 = arith.constant 128 : index
    %c0_14 = arith.constant 0 : index
    %37 = vector.load %arg1[%c128, %c0_14] : memref<1064x128xf32, #tpu.memory_space<vmem>>, vector<128x128xf32>
    %cst_15 = arith.constant dense<0.000000e+00> : vector<128x128xf32>
    %38 = tpu.matmul %36, %37, %cst_15 {dimension_numbers = #tpu.dot_dimension_numbers<[1], [0], [0], [1], [0, 0, 1, 1], [], []>} : vector<128x128xf32>, vector<128x128xf32>, vector<128x128xf32> -> vector<128x128xf32>
    %c1043 = arith.constant 1043 : index
    %c0_16 = arith.constant 0 : index
    %39 = vector.load %arg1[%c1043, %c0_16] : memref<1064x128xf32, #tpu.memory_space<vmem>>, vector<1x128xf32>
    %40 = vector.broadcast %39 : vector<1x128xf32> to vector<128x128xf32>
    %41 = arith.addf %38, %40 : vector<128x128xf32>
    %cst_17 = arith.constant dense<0.000000e+00> : vector<128xf32>
    %42 = vector.multi_reduction <add>, %41, %cst_17 [0] : vector<128x128xf32> to vector<128xf32>
    %43 = vector.shape_cast %42 : vector<128xf32> to vector<1x128xf32>
    %cst_18 = arith.constant 7.812500e-03 : f32
    %44 = vector.broadcast %cst_18 : f32 to vector<1x128xf32>
    %45 = arith.mulf %43, %44 : vector<1x128xf32>
    %46 = arith.mulf %41, %41 : vector<128x128xf32>
    %cst_19 = arith.constant dense<0.000000e+00> : vector<128xf32>
    %47 = vector.multi_reduction <add>, %46, %cst_19 [0] : vector<128x128xf32> to vector<128xf32>
    %48 = vector.shape_cast %47 : vector<128xf32> to vector<1x128xf32>
    %cst_20 = arith.constant 7.812500e-03 : f32
    %49 = vector.broadcast %cst_20 : f32 to vector<1x128xf32>
    %50 = arith.mulf %48, %49 : vector<1x128xf32>
    %51 = arith.mulf %45, %45 : vector<1x128xf32>
    %52 = arith.subf %50, %51 : vector<1x128xf32>
    %cst_21 = arith.constant 0.000000e+00 : f32
    %53 = vector.broadcast %cst_21 : f32 to vector<1x128xf32>
    %54 = arith.maximumf %52, %53 : vector<1x128xf32>
    %c1044 = arith.constant 1044 : index
    %c0_22 = arith.constant 0 : index
    %55 = vector.load %arg1[%c1044, %c0_22] : memref<1064x128xf32, #tpu.memory_space<vmem>>, vector<1x128xf32>
    %56 = vector.broadcast %45 : vector<1x128xf32> to vector<128x128xf32>
    %57 = arith.subf %41, %56 : vector<128x128xf32>
    %cst_23 = arith.constant 9.99999974E-6 : f32
    %58 = vector.broadcast %cst_23 : f32 to vector<1x128xf32>
    %59 = arith.addf %54, %58 : vector<1x128xf32>
    %60 = math.rsqrt %59 : vector<1x128xf32>
    %61 = vector.broadcast %60 : vector<1x128xf32> to vector<128x128xf32>
    %62 = arith.mulf %57, %61 : vector<128x128xf32>
    %63 = vector.broadcast %55 : vector<1x128xf32> to vector<128x128xf32>
    %64 = arith.mulf %63, %62 : vector<128x128xf32>
    %c1045 = arith.constant 1045 : index
    %c0_24 = arith.constant 0 : index
    %65 = vector.load %arg1[%c1045, %c0_24] : memref<1064x128xf32, #tpu.memory_space<vmem>>, vector<1x128xf32>
    %66 = vector.broadcast %65 : vector<1x128xf32> to vector<128x128xf32>
    %67 = arith.addf %64, %66 : vector<128x128xf32>
    %cst_25 = arith.constant 0.000000e+00 : f32
    %68 = vector.broadcast %cst_25 : f32 to vector<128x128xf32>
    %69 = arith.cmpf ogt, %67, %68 : vector<128x128xf32>
    %cst_26 = arith.constant 0.00999999977 : f32
    %70 = vector.broadcast %cst_26 : f32 to vector<128x128xf32>
    %71 = arith.mulf %70, %67 : vector<128x128xf32>
    %72 = arith.select %69, %67, %71 : vector<128x128xi1>, vector<128x128xf32>
    %c256 = arith.constant 256 : index
    %c0_27 = arith.constant 0 : index
    %73 = vector.load %arg1[%c256, %c0_27] : memref<1064x128xf32, #tpu.memory_space<vmem>>, vector<128x128xf32>
    %cst_28 = arith.constant dense<0.000000e+00> : vector<128x128xf32>
    %74 = tpu.matmul %72, %73, %cst_28 {dimension_numbers = #tpu.dot_dimension_numbers<[1], [0], [0], [1], [0, 0, 1, 1], [], []>} : vector<128x128xf32>, vector<128x128xf32>, vector<128x128xf32> -> vector<128x128xf32>
    %c1046 = arith.constant 1046 : index
    %c0_29 = arith.constant 0 : index
    %75 = vector.load %arg1[%c1046, %c0_29] : memref<1064x128xf32, #tpu.memory_space<vmem>>, vector<1x128xf32>
    %76 = vector.broadcast %75 : vector<1x128xf32> to vector<128x128xf32>
    %77 = arith.addf %74, %76 : vector<128x128xf32>
    %cst_30 = arith.constant dense<0.000000e+00> : vector<128xf32>
    %78 = vector.multi_reduction <add>, %77, %cst_30 [0] : vector<128x128xf32> to vector<128xf32>
    %79 = vector.shape_cast %78 : vector<128xf32> to vector<1x128xf32>
    %cst_31 = arith.constant 7.812500e-03 : f32
    %80 = vector.broadcast %cst_31 : f32 to vector<1x128xf32>
    %81 = arith.mulf %79, %80 : vector<1x128xf32>
    %82 = arith.mulf %77, %77 : vector<128x128xf32>
    %cst_32 = arith.constant dense<0.000000e+00> : vector<128xf32>
    %83 = vector.multi_reduction <add>, %82, %cst_32 [0] : vector<128x128xf32> to vector<128xf32>
    %84 = vector.shape_cast %83 : vector<128xf32> to vector<1x128xf32>
    %cst_33 = arith.constant 7.812500e-03 : f32
    %85 = vector.broadcast %cst_33 : f32 to vector<1x128xf32>
    %86 = arith.mulf %84, %85 : vector<1x128xf32>
    %87 = arith.mulf %81, %81 : vector<1x128xf32>
    %88 = arith.subf %86, %87 : vector<1x128xf32>
    %cst_34 = arith.constant 0.000000e+00 : f32
    %89 = vector.broadcast %cst_34 : f32 to vector<1x128xf32>
    %90 = arith.maximumf %88, %89 : vector<1x128xf32>
    %c1047 = arith.constant 1047 : index
    %c0_35 = arith.constant 0 : index
    %91 = vector.load %arg1[%c1047, %c0_35] : memref<1064x128xf32, #tpu.memory_space<vmem>>, vector<1x128xf32>
    %92 = vector.broadcast %81 : vector<1x128xf32> to vector<128x128xf32>
    %93 = arith.subf %77, %92 : vector<128x128xf32>
    %cst_36 = arith.constant 9.99999974E-6 : f32
    %94 = vector.broadcast %cst_36 : f32 to vector<1x128xf32>
    %95 = arith.addf %90, %94 : vector<1x128xf32>
    %96 = math.rsqrt %95 : vector<1x128xf32>
    %97 = vector.broadcast %96 : vector<1x128xf32> to vector<128x128xf32>
    %98 = arith.mulf %93, %97 : vector<128x128xf32>
    %99 = vector.broadcast %91 : vector<1x128xf32> to vector<128x128xf32>
    %100 = arith.mulf %99, %98 : vector<128x128xf32>
    %c1048 = arith.constant 1048 : index
    %c0_37 = arith.constant 0 : index
    %101 = vector.load %arg1[%c1048, %c0_37] : memref<1064x128xf32, #tpu.memory_space<vmem>>, vector<1x128xf32>
    %102 = vector.broadcast %101 : vector<1x128xf32> to vector<128x128xf32>
    %103 = arith.addf %100, %102 : vector<128x128xf32>
    %cst_38 = arith.constant 0.000000e+00 : f32
    %104 = vector.broadcast %cst_38 : f32 to vector<128x128xf32>
    %105 = arith.cmpf ogt, %103, %104 : vector<128x128xf32>
    %cst_39 = arith.constant 0.00999999977 : f32
    %106 = vector.broadcast %cst_39 : f32 to vector<128x128xf32>
    %107 = arith.mulf %106, %103 : vector<128x128xf32>
    %108 = arith.select %105, %103, %107 : vector<128x128xi1>, vector<128x128xf32>
    %c384 = arith.constant 384 : index
    %c0_40 = arith.constant 0 : index
    %109 = vector.load %arg1[%c384, %c0_40] : memref<1064x128xf32, #tpu.memory_space<vmem>>, vector<128x128xf32>
    %cst_41 = arith.constant dense<0.000000e+00> : vector<128x128xf32>
    %110 = tpu.matmul %108, %109, %cst_41 {dimension_numbers = #tpu.dot_dimension_numbers<[1], [0], [0], [1], [0, 0, 1, 1], [], []>} : vector<128x128xf32>, vector<128x128xf32>, vector<128x128xf32> -> vector<128x128xf32>
    %c1049 = arith.constant 1049 : index
    %c0_42 = arith.constant 0 : index
    %111 = vector.load %arg1[%c1049, %c0_42] : memref<1064x128xf32, #tpu.memory_space<vmem>>, vector<1x128xf32>
    %112 = vector.broadcast %111 : vector<1x128xf32> to vector<128x128xf32>
    %113 = arith.addf %110, %112 : vector<128x128xf32>
    %114 = vector.extract_strided_slice %113 {offsets = [0, 0], sizes = [128, 32], strides = [1, 1]} : vector<128x128xf32> to vector<128x32xf32>
    %115 = vector.extract_strided_slice %113 {offsets = [0, 32], sizes = [128, 32], strides = [1, 1]} : vector<128x128xf32> to vector<128x32xf32>
    %116 = arith.addf %114, %115 : vector<128x32xf32>
    %cst_43 = arith.constant 5.000000e-01 : f32
    %117 = vector.broadcast %cst_43 : f32 to vector<128x32xf32>
    %118 = arith.mulf %117, %116 : vector<128x32xf32>
    %119 = vector.extract_strided_slice %118 {offsets = [0, 0], sizes = [128, 16], strides = [1, 1]} : vector<128x32xf32> to vector<128x16xf32>
    %120 = vector.extract_strided_slice %118 {offsets = [0, 16], sizes = [128, 16], strides = [1, 1]} : vector<128x32xf32> to vector<128x16xf32>
    %121 = vector.extract_strided_slice %0 {offsets = [0, 104], sizes = [128, 16], strides = [1, 1]} : vector<128x128xf32> to vector<128x16xf32>
    %cst_44 = arith.constant 5.000000e-01 : f32
    %122 = vector.broadcast %cst_44 : f32 to vector<128x16xf32>
    %123 = arith.mulf %122, %120 : vector<128x16xf32>
    %124 = math.exp %123 : vector<128x16xf32>
    %125 = arith.mulf %121, %124 : vector<128x16xf32>
    %126 = arith.addf %125, %119 : vector<128x16xf32>
    %c512 = arith.constant 512 : index
    %c0_45 = arith.constant 0 : index
    %127 = vector.load %arg1[%c512, %c0_45] : memref<1064x128xf32, #tpu.memory_space<vmem>>, vector<16x128xf32>
    %cst_46 = arith.constant dense<0.000000e+00> : vector<128x128xf32>
    %128 = tpu.matmul %126, %127, %cst_46 {dimension_numbers = #tpu.dot_dimension_numbers<[1], [0], [0], [1], [0, 0, 1, 1], [], []>} : vector<128x16xf32>, vector<16x128xf32>, vector<128x128xf32> -> vector<128x128xf32>
    %c528 = arith.constant 528 : index
    %c0_47 = arith.constant 0 : index
    %129 = vector.load %arg1[%c528, %c0_47] : memref<1064x128xf32, #tpu.memory_space<vmem>>, vector<128x128xf32>
    %cst_48 = arith.constant dense<0.000000e+00> : vector<128x128xf32>
    %130 = tpu.matmul %0, %129, %cst_48 {dimension_numbers = #tpu.dot_dimension_numbers<[1], [0], [0], [1], [0, 0, 1, 1], [], []>} : vector<128x128xf32>, vector<128x128xf32>, vector<128x128xf32> -> vector<128x128xf32>
    %131 = arith.addf %128, %130 : vector<128x128xf32>
    %c1050 = arith.constant 1050 : index
    %c0_49 = arith.constant 0 : index
    %132 = vector.load %arg1[%c1050, %c0_49] : memref<1064x128xf32, #tpu.memory_space<vmem>>, vector<1x128xf32>
    %133 = vector.broadcast %132 : vector<1x128xf32> to vector<128x128xf32>
    %134 = arith.addf %131, %133 : vector<128x128xf32>
    %cst_50 = arith.constant dense<0.000000e+00> : vector<128xf32>
    %135 = vector.multi_reduction <add>, %134, %cst_50 [0] : vector<128x128xf32> to vector<128xf32>
    %136 = vector.shape_cast %135 : vector<128xf32> to vector<1x128xf32>
    %cst_51 = arith.constant 7.812500e-03 : f32
    %137 = vector.broadcast %cst_51 : f32 to vector<1x128xf32>
    %138 = arith.mulf %136, %137 : vector<1x128xf32>
    %139 = arith.mulf %134, %134 : vector<128x128xf32>
    %cst_52 = arith.constant dense<0.000000e+00> : vector<128xf32>
    %140 = vector.multi_reduction <add>, %139, %cst_52 [0] : vector<128x128xf32> to vector<128xf32>
    %141 = vector.shape_cast %140 : vector<128xf32> to vector<1x128xf32>
    %cst_53 = arith.constant 7.812500e-03 : f32
    %142 = vector.broadcast %cst_53 : f32 to vector<1x128xf32>
    %143 = arith.mulf %141, %142 : vector<1x128xf32>
    %144 = arith.mulf %138, %138 : vector<1x128xf32>
    %145 = arith.subf %143, %144 : vector<1x128xf32>
    %cst_54 = arith.constant 0.000000e+00 : f32
    %146 = vector.broadcast %cst_54 : f32 to vector<1x128xf32>
    %147 = arith.maximumf %145, %146 : vector<1x128xf32>
    %c1051 = arith.constant 1051 : index
    %c0_55 = arith.constant 0 : index
    %148 = vector.load %arg1[%c1051, %c0_55] : memref<1064x128xf32, #tpu.memory_space<vmem>>, vector<1x128xf32>
    %149 = vector.broadcast %138 : vector<1x128xf32> to vector<128x128xf32>
    %150 = arith.subf %134, %149 : vector<128x128xf32>
    %cst_56 = arith.constant 9.99999974E-6 : f32
    %151 = vector.broadcast %cst_56 : f32 to vector<1x128xf32>
    %152 = arith.addf %147, %151 : vector<1x128xf32>
    %153 = math.rsqrt %152 : vector<1x128xf32>
    %154 = vector.broadcast %153 : vector<1x128xf32> to vector<128x128xf32>
    %155 = arith.mulf %150, %154 : vector<128x128xf32>
    %156 = vector.broadcast %148 : vector<1x128xf32> to vector<128x128xf32>
    %157 = arith.mulf %156, %155 : vector<128x128xf32>
    %c1052 = arith.constant 1052 : index
    %c0_57 = arith.constant 0 : index
    %158 = vector.load %arg1[%c1052, %c0_57] : memref<1064x128xf32, #tpu.memory_space<vmem>>, vector<1x128xf32>
    %159 = vector.broadcast %158 : vector<1x128xf32> to vector<128x128xf32>
    %160 = arith.addf %157, %159 : vector<128x128xf32>
    %cst_58 = arith.constant 0.000000e+00 : f32
    %161 = vector.broadcast %cst_58 : f32 to vector<128x128xf32>
    %162 = arith.cmpf ogt, %160, %161 : vector<128x128xf32>
    %cst_59 = arith.constant 0.00999999977 : f32
    %163 = vector.broadcast %cst_59 : f32 to vector<128x128xf32>
    %164 = arith.mulf %163, %160 : vector<128x128xf32>
    %165 = arith.select %162, %160, %164 : vector<128x128xi1>, vector<128x128xf32>
    %c656 = arith.constant 656 : index
    %c0_60 = arith.constant 0 : index
    %166 = vector.load %arg1[%c656, %c0_60] : memref<1064x128xf32, #tpu.memory_space<vmem>>, vector<128x128xf32>
    %cst_61 = arith.constant dense<0.000000e+00> : vector<128x128xf32>
    %167 = tpu.matmul %165, %166, %cst_61 {dimension_numbers = #tpu.dot_dimension_numbers<[1], [0], [0], [1], [0, 0, 1, 1], [], []>} : vector<128x128xf32>, vector<128x128xf32>, vector<128x128xf32> -> vector<128x128xf32>
    %c1053 = arith.constant 1053 : index
    %c0_62 = arith.constant 0 : index
    %168 = vector.load %arg1[%c1053, %c0_62] : memref<1064x128xf32, #tpu.memory_space<vmem>>, vector<1x128xf32>
    %169 = vector.broadcast %168 : vector<1x128xf32> to vector<128x128xf32>
    %170 = arith.addf %167, %169 : vector<128x128xf32>
    %cst_63 = arith.constant dense<0.000000e+00> : vector<128xf32>
    %171 = vector.multi_reduction <add>, %170, %cst_63 [0] : vector<128x128xf32> to vector<128xf32>
    %172 = vector.shape_cast %171 : vector<128xf32> to vector<1x128xf32>
    %cst_64 = arith.constant 7.812500e-03 : f32
    %173 = vector.broadcast %cst_64 : f32 to vector<1x128xf32>
    %174 = arith.mulf %172, %173 : vector<1x128xf32>
    %175 = arith.mulf %170, %170 : vector<128x128xf32>
    %cst_65 = arith.constant dense<0.000000e+00> : vector<128xf32>
    %176 = vector.multi_reduction <add>, %175, %cst_65 [0] : vector<128x128xf32> to vector<128xf32>
    %177 = vector.shape_cast %176 : vector<128xf32> to vector<1x128xf32>
    %cst_66 = arith.constant 7.812500e-03 : f32
    %178 = vector.broadcast %cst_66 : f32 to vector<1x128xf32>
    %179 = arith.mulf %177, %178 : vector<1x128xf32>
    %180 = arith.mulf %174, %174 : vector<1x128xf32>
    %181 = arith.subf %179, %180 : vector<1x128xf32>
    %cst_67 = arith.constant 0.000000e+00 : f32
    %182 = vector.broadcast %cst_67 : f32 to vector<1x128xf32>
    %183 = arith.maximumf %181, %182 : vector<1x128xf32>
    %c1054 = arith.constant 1054 : index
    %c0_68 = arith.constant 0 : index
    %184 = vector.load %arg1[%c1054, %c0_68] : memref<1064x128xf32, #tpu.memory_space<vmem>>, vector<1x128xf32>
    %185 = vector.broadcast %174 : vector<1x128xf32> to vector<128x128xf32>
    %186 = arith.subf %170, %185 : vector<128x128xf32>
    %cst_69 = arith.constant 9.99999974E-6 : f32
    %187 = vector.broadcast %cst_69 : f32 to vector<1x128xf32>
    %188 = arith.addf %183, %187 : vector<1x128xf32>
    %189 = math.rsqrt %188 : vector<1x128xf32>
    %190 = vector.broadcast %189 : vector<1x128xf32> to vector<128x128xf32>
    %191 = arith.mulf %186, %190 : vector<128x128xf32>
    %192 = vector.broadcast %184 : vector<1x128xf32> to vector<128x128xf32>
    %193 = arith.mulf %192, %191 : vector<128x128xf32>
    %c1055 = arith.constant 1055 : index
    %c0_70 = arith.constant 0 : index
    %194 = vector.load %arg1[%c1055, %c0_70] : memref<1064x128xf32, #tpu.memory_space<vmem>>, vector<1x128xf32>
    %195 = vector.broadcast %194 : vector<1x128xf32> to vector<128x128xf32>
    %196 = arith.addf %193, %195 : vector<128x128xf32>
    %cst_71 = arith.constant 0.000000e+00 : f32
    %197 = vector.broadcast %cst_71 : f32 to vector<128x128xf32>
    %198 = arith.cmpf ogt, %196, %197 : vector<128x128xf32>
    %cst_72 = arith.constant 0.00999999977 : f32
    %199 = vector.broadcast %cst_72 : f32 to vector<128x128xf32>
    %200 = arith.mulf %199, %196 : vector<128x128xf32>
    %201 = arith.select %198, %196, %200 : vector<128x128xi1>, vector<128x128xf32>
    %c784 = arith.constant 784 : index
    %c0_73 = arith.constant 0 : index
    %202 = vector.load %arg1[%c784, %c0_73] : memref<1064x128xf32, #tpu.memory_space<vmem>>, vector<128x128xf32>
    %cst_74 = arith.constant dense<0.000000e+00> : vector<128x128xf32>
    %203 = tpu.matmul %201, %202, %cst_74 {dimension_numbers = #tpu.dot_dimension_numbers<[1], [0], [0], [1], [0, 0, 1, 1], [], []>} : vector<128x128xf32>, vector<128x128xf32>, vector<128x128xf32> -> vector<128x128xf32>
    %c1056 = arith.constant 1056 : index
    %c0_75 = arith.constant 0 : index
    %204 = vector.load %arg1[%c1056, %c0_75] : memref<1064x128xf32, #tpu.memory_space<vmem>>, vector<1x128xf32>
    %205 = vector.broadcast %204 : vector<1x128xf32> to vector<128x128xf32>
    %206 = arith.addf %203, %205 : vector<128x128xf32>
    %cst_76 = arith.constant dense<0.000000e+00> : vector<128xf32>
    %207 = vector.multi_reduction <add>, %206, %cst_76 [0] : vector<128x128xf32> to vector<128xf32>
    %208 = vector.shape_cast %207 : vector<128xf32> to vector<1x128xf32>
    %cst_77 = arith.constant 7.812500e-03 : f32
    %209 = vector.broadcast %cst_77 : f32 to vector<1x128xf32>
    %210 = arith.mulf %208, %209 : vector<1x128xf32>
    %211 = arith.mulf %206, %206 : vector<128x128xf32>
    %cst_78 = arith.constant dense<0.000000e+00> : vector<128xf32>
    %212 = vector.multi_reduction <add>, %211, %cst_78 [0] : vector<128x128xf32> to vector<128xf32>
    %213 = vector.shape_cast %212 : vector<128xf32> to vector<1x128xf32>
    %cst_79 = arith.constant 7.812500e-03 : f32
    %214 = vector.broadcast %cst_79 : f32 to vector<1x128xf32>
    %215 = arith.mulf %213, %214 : vector<1x128xf32>
    %216 = arith.mulf %210, %210 : vector<1x128xf32>
    %217 = arith.subf %215, %216 : vector<1x128xf32>
    %cst_80 = arith.constant 0.000000e+00 : f32
    %218 = vector.broadcast %cst_80 : f32 to vector<1x128xf32>
    %219 = arith.maximumf %217, %218 : vector<1x128xf32>
    %c1057 = arith.constant 1057 : index
    %c0_81 = arith.constant 0 : index
    %220 = vector.load %arg1[%c1057, %c0_81] : memref<1064x128xf32, #tpu.memory_space<vmem>>, vector<1x128xf32>
    %221 = vector.broadcast %210 : vector<1x128xf32> to vector<128x128xf32>
    %222 = arith.subf %206, %221 : vector<128x128xf32>
    %cst_82 = arith.constant 9.99999974E-6 : f32
    %223 = vector.broadcast %cst_82 : f32 to vector<1x128xf32>
    %224 = arith.addf %219, %223 : vector<1x128xf32>
    %225 = math.rsqrt %224 : vector<1x128xf32>
    %226 = vector.broadcast %225 : vector<1x128xf32> to vector<128x128xf32>
    %227 = arith.mulf %222, %226 : vector<128x128xf32>
    %228 = vector.broadcast %220 : vector<1x128xf32> to vector<128x128xf32>
    %229 = arith.mulf %228, %227 : vector<128x128xf32>
    %c1058 = arith.constant 1058 : index
    %c0_83 = arith.constant 0 : index
    %230 = vector.load %arg1[%c1058, %c0_83] : memref<1064x128xf32, #tpu.memory_space<vmem>>, vector<1x128xf32>
    %231 = vector.broadcast %230 : vector<1x128xf32> to vector<128x128xf32>
    %232 = arith.addf %229, %231 : vector<128x128xf32>
    %cst_84 = arith.constant 0.000000e+00 : f32
    %233 = vector.broadcast %cst_84 : f32 to vector<128x128xf32>
    %234 = arith.cmpf ogt, %232, %233 : vector<128x128xf32>
    %cst_85 = arith.constant 0.00999999977 : f32
    %235 = vector.broadcast %cst_85 : f32 to vector<128x128xf32>
    %236 = arith.mulf %235, %232 : vector<128x128xf32>
    %237 = arith.select %234, %232, %236 : vector<128x128xi1>, vector<128x128xf32>
    %c912 = arith.constant 912 : index
    %c0_86 = arith.constant 0 : index
    %238 = vector.load %arg1[%c912, %c0_86] : memref<1064x128xf32, #tpu.memory_space<vmem>>, vector<128x128xf32>
    %cst_87 = arith.constant dense<0.000000e+00> : vector<128x128xf32>
    %239 = tpu.matmul %237, %238, %cst_87 {dimension_numbers = #tpu.dot_dimension_numbers<[1], [0], [0], [1], [0, 0, 1, 1], [], []>} : vector<128x128xf32>, vector<128x128xf32>, vector<128x128xf32> -> vector<128x128xf32>
    %c1059 = arith.constant 1059 : index
    %c0_88 = arith.constant 0 : index
    %240 = vector.load %arg1[%c1059, %c0_88] : memref<1064x128xf32, #tpu.memory_space<vmem>>, vector<1x128xf32>
    %241 = vector.broadcast %240 : vector<1x128xf32> to vector<128x128xf32>
    %242 = arith.addf %239, %241 : vector<128x128xf32>
    %c0_89 = arith.constant 0 : index
    %c0_90 = arith.constant 0 : index
    %243 = vector.load %arg2[%c0_89, %c0_90] : memref<128x384xf32, #tpu.memory_space<vmem>>, vector<128x128xf32>
    tpu.vector_store %arg2[%c0_89, %c0_90], %113 {strides = array<i32>} : memref<128x384xf32, #tpu.memory_space<vmem>>, vector<128x128xf32>,
    %c0_91 = arith.constant 0 : index
    %c128_92 = arith.constant 128 : index
    %244 = vector.load %arg2[%c0_91, %c128_92] : memref<128x384xf32, #tpu.memory_space<vmem>>, vector<128x128xf32>
    tpu.vector_store %arg2[%c0_91, %c128_92], %242 {strides = array<i32>} : memref<128x384xf32, #tpu.memory_space<vmem>>, vector<128x128xf32>,
    %cst_93 = arith.constant 0.000000e+00 : f32
    %245 = vector.broadcast %cst_93 : f32 to vector<128x96xf32>
    %246 = tpu.concatenate %118, %245 in 1 : vector<128x32xf32>, vector<128x96xf32> -> vector<128x128xf32>
    %c0_94 = arith.constant 0 : index
    %c256_95 = arith.constant 256 : index
    %247 = vector.load %arg2[%c0_94, %c256_95] : memref<128x384xf32, #tpu.memory_space<vmem>>, vector<128x128xf32>
    tpu.vector_store %arg2[%c0_94, %c256_95], %246 {strides = array<i32>} : memref<128x384xf32, #tpu.memory_space<vmem>>, vector<128x128xf32>,
    return
  }
}

</mosaic_0001>

<llo_original>
// kernel: forward.1
$region0: #{forward.1}
  #allocation0 [shape = 'u32[]', space=smem, size = 0x4, offset = 0x4, fixed_abs, tag = 'smem constant byte address 0x4 - core index']
  #allocation1 [shape = 'u32[72,128]{1,0:T(1,128)}', space=vmem, size = 0x9000, scoped, tag = 'internal scratch']
  %s0 = inlined_call_operand.vmem [shape: f32[128,128], index: 0, kind: input, shape index: {}]
  %s1 = inlined_call_operand.vmem [shape: f32[1064,128], index: 1, kind: input, shape index: {}]
  %s2 = inlined_call_operand.vmem [shape: f32[128,384], index: 2, kind: output, shape index: {}]
  %s3 = sld [smem:[#allocation0]]
  $region18: #{forward.1} parent=0
    _
  %s5 = ssub.s32 1, %s3
  %s6 = scalar_select 0, %s5, %s3
  // Predicated region
  $region2: #{forward.1} parent=0 // pred_check
    _
  $region3: #{forward.1} parent=0 // pred_check_branch
    %8 = sbr.rel (0) target = $region5
  $region4: #{forward.1} parent=0 // pred_region
    _
  $region5: #{forward.1} parent=0 // pred_fallthru
    _
  // Predicated region
  $region6: #{forward.1} parent=0 // pred_check
    _
  $region7: #{forward.1} parent=0 // pred_check_branch
    %10 = sbr.rel (0) target = $region9
  $region8: #{forward.1} parent=0 // pred_region
    _
  $region9: #{forward.1} parent=0 // pred_fallthru
    _
  %v11 = vld [vmem:[%s0] sm:$0xff]
  %v12 = vld [vmem:[%s0 + $0x8] sm:$0xff]
  %v13 = vld [vmem:[%s0 + $0x10] sm:$0xff]
  %v14 = vld [vmem:[%s0 + $0x18] sm:$0xff]
  %v15 = vld [vmem:[%s0 + $0x20] sm:$0xff]
  %v16 = vld [vmem:[%s0 + $0x28] sm:$0xff]
  %v17 = vld [vmem:[%s0 + $0x30] sm:$0xff]
  %v18 = vld [vmem:[%s0 + $0x38] sm:$0xff]
  %v19 = vld [vmem:[%s0 + $0x40] sm:$0xff]
  %v20 = vld [vmem:[%s0 + $0x48] sm:$0xff]
  %v21 = vld [vmem:[%s0 + $0x50] sm:$0xff]
  %v22 = vld [vmem:[%s0 + $0x58] sm:$0xff]
  %v23 = vld [vmem:[%s0 + $0x60] sm:$0xff]
  %v24 = vld [vmem:[%s0 + $0x68] sm:$0xff]
  %v25 = vld [vmem:[%s0 + $0x70] sm:$0xff]
  %v26 = vld [vmem:[%s0 + $0x78] sm:$0xff]
  %v27 = vld [vmem:[%s1] sm:$0xff]
  %v28 = vld [vmem:[%s1 + $0x8] sm:$0xff]
  %v29 = vld [vmem:[%s1 + $0x10] sm:$0xff]
  %v30 = vld [vmem:[%s1 + $0x18] sm:$0xff]
  %v31 = vld [vmem:[%s1 + $0x20] sm:$0xff]
  %v32 = vld [vmem:[%s1 + $0x28] sm:$0xff]
  %v33 = vld [vmem:[%s1 + $0x30] sm:$0xff]
  %v34 = vld [vmem:[%s1 + $0x38] sm:$0xff]
  %v35 = vld [vmem:[%s1 + $0x40] sm:$0xff]
  %v36 = vld [vmem:[%s1 + $0x48] sm:$0xff]
  %v37 = vld [vmem:[%s1 + $0x50] sm:$0xff]
  %v38 = vld [vmem:[%s1 + $0x58] sm:$0xff]
  %v39 = vld [vmem:[%s1 + $0x60] sm:$0xff]
  %v40 = vld [vmem:[%s1 + $0x68] sm:$0xff]
  %v41 = vld [vmem:[%s1 + $0x70] sm:$0xff]
  %v42 = vld [vmem:[%s1 + $0x78] sm:$0xff]
  %v43 = vld [vmem:[%s1 + $0x410] sm:$0x1]
  %v44 = vperm.slane %v43, 0
  %45 = vmatpush.msra.mxu0 %v42
  %46 = vmatpush.msra.mxu0 %v41
  %47 = vmatpush.msra.mxu0 %v40
  %48 = vmatpush.msra.mxu0 %v39
  %49 = vmatpush.msra.mxu0 %v38
  %50 = vmatpush.msra.mxu0 %v37
  %51 = vmatpush.msra.mxu0 %v36
  %52 = vmatpush.msra.mxu0 %v35
  %53 = vmatpush.msra.mxu0 %v34
  %54 = vmatpush.msra.mxu0 %v33
  %55 = vmatpush.msra.mxu0 %v32
  %56 = vmatpush.msra.mxu0 %v31
  %57 = vmatpush.msra.mxu0 %v30
  %58 = vmatpush.msra.mxu0 %v29
  %59 = vmatpush.msra.mxu0 %v28
  %60 = vmatpush.msra.mxu0 %v27
  %61 = vmatmul.f32.gmra.mxu0 %v11
  %v62 = vpop.f32.mrf.mxu0
  %v63 = vadd.f32 %v44, %v62
  %64 = vmatmul.f32.gmra.mxu0 %v12
  %v65 = vpop.f32.mrf.mxu0
  %v66 = vadd.f32 %v44, %v65
  %67 = vmatmul.f32.gmra.mxu0 %v13
  %v68 = vpop.f32.mrf.mxu0
  %v69 = vadd.f32 %v44, %v68
  %70 = vmatmul.f32.gmra.mxu0 %v14
  %v71 = vpop.f32.mrf.mxu0
  %v72 = vadd.f32 %v44, %v71
  %73 = vmatmul.f32.gmra.mxu0 %v15
  %v74 = vpop.f32.mrf.mxu0
  %v75 = vadd.f32 %v44, %v74
  %76 = vmatmul.f32.gmra.mxu0 %v16
  %v77 = vpop.f32.mrf.mxu0
  %v78 = vadd.f32 %v44, %v77
  %79 = vmatmul.f32.gmra.mxu0 %v17
  %v80 = vpop.f32.mrf.mxu0
  %v81 = vadd.f32 %v44, %v80
  %82 = vmatmul.f32.gmra.mxu0 %v18
  %v83 = vpop.f32.mrf.mxu0
  %v84 = vadd.f32 %v44, %v83
  %85 = vmatmul.f32.gmra.mxu0 %v19
  %v86 = vpop.f32.mrf.mxu0
  %v87 = vadd.f32 %v44, %v86
  %88 = vmatmul.f32.gmra.mxu0 %v20
  %v89 = vpop.f32.mrf.mxu0
  %v90 = vadd.f32 %v44, %v89
  %91 = vmatmul.f32.gmra.mxu0 %v21
  %v92 = vpop.f32.mrf.mxu0
  %v93 = vadd.f32 %v44, %v92
  %94 = vmatmul.f32.gmra.mxu0 %v22
  %v95 = vpop.f32.mrf.mxu0
  %v96 = vadd.f32 %v44, %v95
  %97 = vmatmul.f32.gmra.mxu0 %v23
  %v98 = vpop.f32.mrf.mxu0
  %v99 = vadd.f32 %v44, %v98
  %100 = vmatmul.f32.gmra.mxu0 %v24
  %v101 = vpop.f32.mrf.mxu0
  %v102 = vadd.f32 %v44, %v101
  %103 = vmatmul.f32.gmra.mxu0 %v25
  %v104 = vpop.f32.mrf.mxu0
  %v105 = vadd.f32 %v44, %v104
  %106 = vmatmul.f32.gmra.mxu0 %v26
  %v107 = vpop.f32.mrf.mxu0
  %v108 = vadd.f32 %v44, %v107
  %109 = vdwg.mxu0
  %v110 = vadd.f32 %v63, %v66
  %v111 = vadd.f32 %v110, %v69
  %v112 = vadd.f32 %v111, %v72
  %v113 = vadd.f32 %v112, %v75
  %v114 = vadd.f32 %v113, %v78
  %v115 = vadd.f32 %v114, %v81
  %v116 = vadd.f32 %v115, %v84
  %v117 = vadd.f32 %v116, %v87
  %v118 = vadd.f32 %v117, %v90
  %v119 = vadd.f32 %v118, %v93
  %v120 = vadd.f32 %v119, %v96
  %v121 = vadd.f32 %v120, %v99
  %v122 = vadd.f32 %v121, %v102
  %v123 = vadd.f32 %v122, %v105
  %v124 = vadd.f32 %v123, %v108
  %v125 = vrot.slane %v124, 4
  %v126 = vadd.f32 %v124, %v125
  %v127 = vrot.slane %v126, 2
  %v128 = vadd.f32 %v126, %v127
  %v129 = vrot.slane %v128, 1
  %v130 = vadd.f32 %v128, %v129
  %v131 = vmul.f32 %v130, 0.0078125
  %v132 = vmul.f32 %v63, %v63
  %v133 = vmul.f32 %v66, %v66
  %v134 = vmul.f32 %v69, %v69
  %v135 = vmul.f32 %v72, %v72
  %v136 = vmul.f32 %v75, %v75
  %v137 = vmul.f32 %v78, %v78
  %v138 = vmul.f32 %v81, %v81
  %v139 = vmul.f32 %v84, %v84
  %v140 = vmul.f32 %v87, %v87
  %v141 = vmul.f32 %v90, %v90
  %v142 = vmul.f32 %v93, %v93
  %v143 = vmul.f32 %v96, %v96
  %v144 = vmul.f32 %v99, %v99
  %v145 = vmul.f32 %v102, %v102
  %v146 = vmul.f32 %v105, %v105
  %v147 = vmul.f32 %v108, %v108
  %v148 = vadd.f32 %v132, %v133
  %v149 = vadd.f32 %v148, %v134
  %v150 = vadd.f32 %v149, %v135
  %v151 = vadd.f32 %v150, %v136
  %v152 = vadd.f32 %v151, %v137
  %v153 = vadd.f32 %v152, %v138
  %v154 = vadd.f32 %v153, %v139
  %v155 = vadd.f32 %v154, %v140
  %v156 = vadd.f32 %v155, %v141
  %v157 = vadd.f32 %v156, %v142
  %v158 = vadd.f32 %v157, %v143
  %v159 = vadd.f32 %v158, %v144
  %v160 = vadd.f32 %v159, %v145
  %v161 = vadd.f32 %v160, %v146
  %v162 = vadd.f32 %v161, %v147
  %v163 = vrot.slane %v162, 4
  %v164 = vadd.f32 %v162, %v163
  %v165 = vrot.slane %v164, 2
  %v166 = vadd.f32 %v164, %v165
  %v167 = vrot.slane %v166, 1
  %v168 = vadd.f32 %v166, %v167
  %v169 = vmul.f32 %v168, 0.0078125
  %v170 = vmul.f32 %v131, %v131
  %v171 = vsub.f32 %v169, %v170
  %v172 = vmax.f32 %v171, 0.0
  %v173 = vld [vmem:[%s1 + $0x411] sm:$0x1]
  %v174 = vsub.f32 %v63, %v131
  %v175 = vsub.f32 %v66, %v131
  %v176 = vsub.f32 %v69, %v131
  %v177 = vsub.f32 %v72, %v131
  %v178 = vsub.f32 %v75, %v131
  %v179 = vsub.f32 %v78, %v131
  %v180 = vsub.f32 %v81, %v131
  %v181 = vsub.f32 %v84, %v131
  %v182 = vsub.f32 %v87, %v131
  %v183 = vsub.f32 %v90, %v131
  %v184 = vsub.f32 %v93, %v131
  %v185 = vsub.f32 %v96, %v131
  %v186 = vsub.f32 %v99, %v131
  %v187 = vsub.f32 %v102, %v131
  %v188 = vsub.f32 %v105, %v131
  %v189 = vsub.f32 %v108, %v131
  %v190 = vadd.f32 %v172, 1e-05
  %v191 = vrsqrt.pop %v190
  %v192 = vmul.f32 %v191, %v190
  %v193 = vmul.f32 %v192, %v191
  %v194 = vmul.f32 0.5, %v193
  %v195 = vsub.f32 1.5, %v194
  %v196 = vmul.f32 %v191, %v195
  %vm197 = vweird.f32 %v190
  %vm198 = vweird.f32 %v191
  %vm199 = vmor %vm197, %vm198
  %v200 = vsel %vm199, %v191, %v196
  %v201 = vmul.f32 %v174, %v200
  %v202 = vmul.f32 %v175, %v200
  %v203 = vmul.f32 %v176, %v200
  %v204 = vmul.f32 %v177, %v200
  %v205 = vmul.f32 %v178, %v200
  %v206 = vmul.f32 %v179, %v200
  %v207 = vmul.f32 %v180, %v200
  %v208 = vmul.f32 %v181, %v200
  %v209 = vmul.f32 %v182, %v200
  %v210 = vmul.f32 %v183, %v200
  %v211 = vmul.f32 %v184, %v200
  %v212 = vmul.f32 %v185, %v200
  %v213 = vmul.f32 %v186, %v200
  %v214 = vmul.f32 %v187, %v200
  %v215 = vmul.f32 %v188, %v200
  %v216 = vmul.f32 %v189, %v200
  %v217 = vperm.slane %v173, 0
  %v218 = vmul.f32 %v217, %v201
  %v219 = vmul.f32 %v217, %v202
  %v220 = vmul.f32 %v217, %v203
  %v221 = vmul.f32 %v217, %v204
  %v222 = vmul.f32 %v217, %v205
  %v223 = vmul.f32 %v217, %v206
  %v224 = vmul.f32 %v217, %v207
  %v225 = vmul.f32 %v217, %v208
  %v226 = vmul.f32 %v217, %v209
  %v227 = vmul.f32 %v217, %v210
  %v228 = vmul.f32 %v217, %v211
  %v229 = vmul.f32 %v217, %v212
  %v230 = vmul.f32 %v217, %v213
  %v231 = vmul.f32 %v217, %v214
  %v232 = vmul.f32 %v217, %v215
  %v233 = vmul.f32 %v217, %v216
  %v234 = vld [vmem:[%s1 + $0x412] sm:$0x1]
  %v235 = vperm.slane %v234, 0
  %v236 = vadd.f32 %v218, %v235
  %v237 = vadd.f32 %v219, %v235
  %v238 = vadd.f32 %v220, %v235
  %v239 = vadd.f32 %v221, %v235
  %v240 = vadd.f32 %v222, %v235
  %v241 = vadd.f32 %v223, %v235
  %v242 = vadd.f32 %v224, %v235
  %v243 = vadd.f32 %v225, %v235
  %v244 = vadd.f32 %v226, %v235
  %v245 = vadd.f32 %v227, %v235
  %v246 = vadd.f32 %v228, %v235
  %v247 = vadd.f32 %v229, %v235
  %v248 = vadd.f32 %v230, %v235
  %v249 = vadd.f32 %v231, %v235
  %v250 = vadd.f32 %v232, %v235
  %v251 = vadd.f32 %v233, %v235
  %vm252 = vcmp.gt.f32.partialorder %v236, 0.0
  %vm253 = vcmp.gt.f32.partialorder %v237, 0.0
  %vm254 = vcmp.gt.f32.partialorder %v238, 0.0
  %vm255 = vcmp.gt.f32.partialorder %v239, 0.0
  %vm256 = vcmp.gt.f32.partialorder %v240, 0.0
  %vm257 = vcmp.gt.f32.partialorder %v241, 0.0
  %vm258 = vcmp.gt.f32.partialorder %v242, 0.0
  %vm259 = vcmp.gt.f32.partialorder %v243, 0.0
  %vm260 = vcmp.gt.f32.partialorder %v244, 0.0
  %vm261 = vcmp.gt.f32.partialorder %v245, 0.0
  %vm262 = vcmp.gt.f32.partialorder %v246, 0.0
  %vm263 = vcmp.gt.f32.partialorder %v247, 0.0
  %vm264 = vcmp.gt.f32.partialorder %v248, 0.0
  %vm265 = vcmp.gt.f32.partialorder %v249, 0.0
  %vm266 = vcmp.gt.f32.partialorder %v250, 0.0
  %vm267 = vcmp.gt.f32.partialorder %v251, 0.0
  %v268 = vmul.f32 %v236, 0.01
  %v269 = vmul.f32 %v237, 0.01
  %v270 = vmul.f32 %v238, 0.01
  %v271 = vmul.f32 %v239, 0.01
  %v272 = vmul.f32 %v240, 0.01
  %v273 = vmul.f32 %v241, 0.01
  %v274 = vmul.f32 %v242, 0.01
  %v275 = vmul.f32 %v243, 0.01
  %v276 = vmul.f32 %v244, 0.01
  %v277 = vmul.f32 %v245, 0.01
  %v278 = vmul.f32 %v246, 0.01
  %v279 = vmul.f32 %v247, 0.01
  %v280 = vmul.f32 %v248, 0.01
  %v281 = vmul.f32 %v249, 0.01
  %v282 = vmul.f32 %v250, 0.01
  %v283 = vmul.f32 %v251, 0.01
  %v284 = vsel %vm252, %v236, %v268
  %v285 = vsel %vm253, %v237, %v269
  %v286 = vsel %vm254, %v238, %v270
  %v287 = vsel %vm255, %v239, %v271
  %v288 = vsel %vm256, %v240, %v272
  %v289 = vsel %vm257, %v241, %v273
  %v290 = vsel %vm258, %v242, %v274
  %v291 = vsel %vm259, %v243, %v275
  %v292 = vsel %vm260, %v244, %v276
  %v293 = vsel %vm261, %v245, %v277
  %v294 = vsel %vm262, %v246, %v278
  %v295 = vsel %vm263, %v247, %v279
  %v296 = vsel %vm264, %v248, %v280
  %v297 = vsel %vm265, %v249, %v281
  %v298 = vsel %vm266, %v250, %v282
  %v299 = vsel %vm267, %v251, %v283
  %v300 = vld [vmem:[%s1 + $0x80] sm:$0xff]
  %v301 = vld [vmem:[%s1 + $0x88] sm:$0xff]
  %v302 = vld [vmem:[%s1 + $0x90] sm:$0xff]
  %v303 = vld [vmem:[%s1 + $0x98] sm:$0xff]
  %v304 = vld [vmem:[%s1 + $0xa0] sm:$0xff]
  %v305 = vld [vmem:[%s1 + $0xa8] sm:$0xff]
  %v306 = vld [vmem:[%s1 + $0xb0] sm:$0xff]
  %v307 = vld [vmem:[%s1 + $0xb8] sm:$0xff]
  %v308 = vld [vmem:[%s1 + $0xc0] sm:$0xff]
  %v309 = vld [vmem:[%s1 + $0xc8] sm:$0xff]
  %v310 = vld [vmem:[%s1 + $0xd0] sm:$0xff]
  %v311 = vld [vmem:[%s1 + $0xd8] sm:$0xff]
  %v312 = vld [vmem:[%s1 + $0xe0] sm:$0xff]
  %v313 = vld [vmem:[%s1 + $0xe8] sm:$0xff]
  %v314 = vld [vmem:[%s1 + $0xf0] sm:$0xff]
  %v315 = vld [vmem:[%s1 + $0xf8] sm:$0xff]
  %v316 = vld [vmem:[%s1 + $0x413] sm:$0x1]
  %v317 = vperm.slane %v316, 0
  %318 = vmatpush.msra.mxu0 %v315
  %319 = vmatpush.msra.mxu0 %v314
  %320 = vmatpush.msra.mxu0 %v313
  %321 = vmatpush.msra.mxu0 %v312
  %322 = vmatpush.msra.mxu0 %v311
  %323 = vmatpush.msra.mxu0 %v310
  %324 = vmatpush.msra.mxu0 %v309
  %325 = vmatpush.msra.mxu0 %v308
  %326 = vmatpush.msra.mxu0 %v307
  %327 = vmatpush.msra.mxu0 %v306
  %328 = vmatpush.msra.mxu0 %v305
  %329 = vmatpush.msra.mxu0 %v304
  %330 = vmatpush.msra.mxu0 %v303
  %331 = vmatpush.msra.mxu0 %v302
  %332 = vmatpush.msra.mxu0 %v301
  %333 = vmatpush.msra.mxu0 %v300
  %334 = vmatmul.f32.gmra.mxu0 %v284
  %v335 = vpop.f32.mrf.mxu0
  %v336 = vadd.f32 %v317, %v335
  %337 = vmatmul.f32.gmra.mxu0 %v285
  %v338 = vpop.f32.mrf.mxu0
  %v339 = vadd.f32 %v317, %v338
  %340 = vmatmul.f32.gmra.mxu0 %v286
  %v341 = vpop.f32.mrf.mxu0
  %v342 = vadd.f32 %v317, %v341
  %343 = vmatmul.f32.gmra.mxu0 %v287
  %v344 = vpop.f32.mrf.mxu0
  %v345 = vadd.f32 %v317, %v344
  %346 = vmatmul.f32.gmra.mxu0 %v288
  %v347 = vpop.f32.mrf.mxu0
  %v348 = vadd.f32 %v317, %v347
  %349 = vmatmul.f32.gmra.mxu0 %v289
  %v350 = vpop.f32.mrf.mxu0
  %v351 = vadd.f32 %v317, %v350
  %352 = vmatmul.f32.gmra.mxu0 %v290
  %v353 = vpop.f32.mrf.mxu0
  %v354 = vadd.f32 %v317, %v353
  %355 = vmatmul.f32.gmra.mxu0 %v291
  %v356 = vpop.f32.mrf.mxu0
  %v357 = vadd.f32 %v317, %v356
  %358 = vmatmul.f32.gmra.mxu0 %v292
  %v359 = vpop.f32.mrf.mxu0
  %v360 = vadd.f32 %v317, %v359
  %361 = vmatmul.f32.gmra.mxu0 %v293
  %v362 = vpop.f32.mrf.mxu0
  %v363 = vadd.f32 %v317, %v362
  %364 = vmatmul.f32.gmra.mxu0 %v294
  %v365 = vpop.f32.mrf.mxu0
  %v366 = vadd.f32 %v317, %v365
  %367 = vmatmul.f32.gmra.mxu0 %v295
  %v368 = vpop.f32.mrf.mxu0
  %v369 = vadd.f32 %v317, %v368
  %370 = vmatmul.f32.gmra.mxu0 %v296
  %v371 = vpop.f32.mrf.mxu0
  %v372 = vadd.f32 %v317, %v371
  %373 = vmatmul.f32.gmra.mxu0 %v297
  %v374 = vpop.f32.mrf.mxu0
  %v375 = vadd.f32 %v317, %v374
  %376 = vmatmul.f32.gmra.mxu0 %v298
  %v377 = vpop.f32.mrf.mxu0
  %v378 = vadd.f32 %v317, %v377
  %379 = vmatmul.f32.gmra.mxu0 %v299
  %v380 = vpop.f32.mrf.mxu0
  %v381 = vadd.f32 %v317, %v380
  %382 = vdwg.mxu0
  %v383 = vadd.f32 %v336, %v339
  %v384 = vadd.f32 %v383, %v342
  %v385 = vadd.f32 %v384, %v345
  %v386 = vadd.f32 %v385, %v348
  %v387 = vadd.f32 %v386, %v351
  %v388 = vadd.f32 %v387, %v354
  %v389 = vadd.f32 %v388, %v357
  %v390 = vadd.f32 %v389, %v360
  %v391 = vadd.f32 %v390, %v363
  %v392 = vadd.f32 %v391, %v366
  %v393 = vadd.f32 %v392, %v369
  %v394 = vadd.f32 %v393, %v372
  %v395 = vadd.f32 %v394, %v375
  %v396 = vadd.f32 %v395, %v378
  %v397 = vadd.f32 %v396, %v381
  %v398 = vrot.slane %v397, 4
  %v399 = vadd.f32 %v397, %v398
  %v400 = vrot.slane %v399, 2
  %v401 = vadd.f32 %v399, %v400
  %v402 = vrot.slane %v401, 1
  %v403 = vadd.f32 %v401, %v402
  %v404 = vmul.f32 %v403, 0.0078125
  %v405 = vmul.f32 %v336, %v336
  %v406 = vmul.f32 %v339, %v339
  %v407 = vmul.f32 %v342, %v342
  %v408 = vmul.f32 %v345, %v345
  %v409 = vmul.f32 %v348, %v348
  %v410 = vmul.f32 %v351, %v351
  %v411 = vmul.f32 %v354, %v354
  %v412 = vmul.f32 %v357, %v357
  %v413 = vmul.f32 %v360, %v360
  %v414 = vmul.f32 %v363, %v363
  %v415 = vmul.f32 %v366, %v366
  %v416 = vmul.f32 %v369, %v369
  %v417 = vmul.f32 %v372, %v372
  %v418 = vmul.f32 %v375, %v375
  %v419 = vmul.f32 %v378, %v378
  %v420 = vmul.f32 %v381, %v381
  %v421 = vadd.f32 %v405, %v406
  %v422 = vadd.f32 %v421, %v407
  %v423 = vadd.f32 %v422, %v408
  %v424 = vadd.f32 %v423, %v409
  %v425 = vadd.f32 %v424, %v410
  %v426 = vadd.f32 %v425, %v411
  %v427 = vadd.f32 %v426, %v412
  %v428 = vadd.f32 %v427, %v413
  %v429 = vadd.f32 %v428, %v414
  %v430 = vadd.f32 %v429, %v415
  %v431 = vadd.f32 %v430, %v416
  %v432 = vadd.f32 %v431, %v417
  %v433 = vadd.f32 %v432, %v418
  %v434 = vadd.f32 %v433, %v419
  %v435 = vadd.f32 %v434, %v420
  %v436 = vrot.slane %v435, 4
  %v437 = vadd.f32 %v435, %v436
  %v438 = vrot.slane %v437, 2
  %v439 = vadd.f32 %v437, %v438
  %v440 = vrot.slane %v439, 1
  %v441 = vadd.f32 %v439, %v440
  %v442 = vmul.f32 %v441, 0.0078125
  %v443 = vmul.f32 %v404, %v404
  %v444 = vsub.f32 %v442, %v443
  %v445 = vmax.f32 %v444, 0.0
  %v446 = vld [vmem:[%s1 + $0x414] sm:$0x1]
  %v447 = vsub.f32 %v336, %v404
  %v448 = vsub.f32 %v339, %v404
  %v449 = vsub.f32 %v342, %v404
  %v450 = vsub.f32 %v345, %v404
  %v451 = vsub.f32 %v348, %v404
  %v452 = vsub.f32 %v351, %v404
  %v453 = vsub.f32 %v354, %v404
  %v454 = vsub.f32 %v357, %v404
  %v455 = vsub.f32 %v360, %v404
  %v456 = vsub.f32 %v363, %v404
  %v457 = vsub.f32 %v366, %v404
  %v458 = vsub.f32 %v369, %v404
  %v459 = vsub.f32 %v372, %v404
  %v460 = vsub.f32 %v375, %v404
  %v461 = vsub.f32 %v378, %v404
  %v462 = vsub.f32 %v381, %v404
  %v463 = vadd.f32 %v445, 1e-05
  %v464 = vrsqrt.pop %v463
  %v465 = vmul.f32 %v464, %v463
  %v466 = vmul.f32 %v465, %v464
  %v467 = vmul.f32 0.5, %v466
  %v468 = vsub.f32 1.5, %v467
  %v469 = vmul.f32 %v464, %v468
  %vm470 = vweird.f32 %v463
  %vm471 = vweird.f32 %v464
  %vm472 = vmor %vm470, %vm471
  %v473 = vsel %vm472, %v464, %v469
  %v474 = vmul.f32 %v447, %v473
  %v475 = vmul.f32 %v448, %v473
  %v476 = vmul.f32 %v449, %v473
  %v477 = vmul.f32 %v450, %v473
  %v478 = vmul.f32 %v451, %v473
  %v479 = vmul.f32 %v452, %v473
  %v480 = vmul.f32 %v453, %v473
  %v481 = vmul.f32 %v454, %v473
  %v482 = vmul.f32 %v455, %v473
  %v483 = vmul.f32 %v456, %v473
  %v484 = vmul.f32 %v457, %v473
  %v485 = vmul.f32 %v458, %v473
  %v486 = vmul.f32 %v459, %v473
  %v487 = vmul.f32 %v460, %v473
  %v488 = vmul.f32 %v461, %v473
  %v489 = vmul.f32 %v462, %v473
  %v490 = vperm.slane %v446, 0
  %v491 = vmul.f32 %v490, %v474
  %v492 = vmul.f32 %v490, %v475
  %v493 = vmul.f32 %v490, %v476
  %v494 = vmul.f32 %v490, %v477
  %v495 = vmul.f32 %v490, %v478
  %v496 = vmul.f32 %v490, %v479
  %v497 = vmul.f32 %v490, %v480
  %v498 = vmul.f32 %v490, %v481
  %v499 = vmul.f32 %v490, %v482
  %v500 = vmul.f32 %v490, %v483
  %v501 = vmul.f32 %v490, %v484
  %v502 = vmul.f32 %v490, %v485
  %v503 = vmul.f32 %v490, %v486
  %v504 = vmul.f32 %v490, %v487
  %v505 = vmul.f32 %v490, %v488
  %v506 = vmul.f32 %v490, %v489
  %v507 = vld [vmem:[%s1 + $0x415] sm:$0x1]
  %v508 = vperm.slane %v507, 0
  %v509 = vadd.f32 %v491, %v508
  %v510 = vadd.f32 %v492, %v508
  %v511 = vadd.f32 %v493, %v508
  %v512 = vadd.f32 %v494, %v508
  %v513 = vadd.f32 %v495, %v508
  %v514 = vadd.f32 %v496, %v508
  %v515 = vadd.f32 %v497, %v508
  %v516 = vadd.f32 %v498, %v508
  %v517 = vadd.f32 %v499, %v508
  %v518 = vadd.f32 %v500, %v508
  %v519 = vadd.f32 %v501, %v508
  %v520 = vadd.f32 %v502, %v508
  %v521 = vadd.f32 %v503, %v508
  %v522 = vadd.f32 %v504, %v508
  %v523 = vadd.f32 %v505, %v508
  %v524 = vadd.f32 %v506, %v508
  %vm525 = vcmp.gt.f32.partialorder %v509, 0.0
  %vm526 = vcmp.gt.f32.partialorder %v510, 0.0
  %vm527 = vcmp.gt.f32.partialorder %v511, 0.0
  %vm528 = vcmp.gt.f32.partialorder %v512, 0.0
  %vm529 = vcmp.gt.f32.partialorder %v513, 0.0
  %vm530 = vcmp.gt.f32.partialorder %v514, 0.0
  %vm531 = vcmp.gt.f32.partialorder %v515, 0.0
  %vm532 = vcmp.gt.f32.partialorder %v516, 0.0
  %vm533 = vcmp.gt.f32.partialorder %v517, 0.0
  %vm534 = vcmp.gt.f32.partialorder %v518, 0.0
  %vm535 = vcmp.gt.f32.partialorder %v519, 0.0
  %vm536 = vcmp.gt.f32.partialorder %v520, 0.0
  %vm537 = vcmp.gt.f32.partialorder %v521, 0.0
  %vm538 = vcmp.gt.f32.partialorder %v522, 0.0
  %vm539 = vcmp.gt.f32.partialorder %v523, 0.0
  %vm540 = vcmp.gt.f32.partialorder %v524, 0.0
  %v541 = vmul.f32 %v509, 0.01
  %v542 = vmul.f32 %v510, 0.01
  %v543 = vmul.f32 %v511, 0.01
  %v544 = vmul.f32 %v512, 0.01
  %v545 = vmul.f32 %v513, 0.01
  %v546 = vmul.f32 %v514, 0.01
  %v547 = vmul.f32 %v515, 0.01
  %v548 = vmul.f32 %v516, 0.01
  %v549 = vmul.f32 %v517, 0.01
  %v550 = vmul.f32 %v518, 0.01
  %v551 = vmul.f32 %v519, 0.01
  %v552 = vmul.f32 %v520, 0.01
  %v553 = vmul.f32 %v521, 0.01
  %v554 = vmul.f32 %v522, 0.01
  %v555 = vmul.f32 %v523, 0.01
  %v556 = vmul.f32 %v524, 0.01
  %v557 = vsel %vm525, %v509, %v541
  %v558 = vsel %vm526, %v510, %v542
  %v559 = vsel %vm527, %v511, %v543
  %v560 = vsel %vm528, %v512, %v544
  %v561 = vsel %vm529, %v513, %v545
  %v562 = vsel %vm530, %v514, %v546
  %v563 = vsel %vm531, %v515, %v547
  %v564 = vsel %vm532, %v516, %v548
  %v565 = vsel %vm533, %v517, %v549
  %v566 = vsel %vm534, %v518, %v550
  %v567 = vsel %vm535, %v519, %v551
  %v568 = vsel %vm536, %v520, %v552
  %v569 = vsel %vm537, %v521, %v553
  %v570 = vsel %vm538, %v522, %v554
  %v571 = vsel %vm539, %v523, %v555
  %v572 = vsel %vm540, %v524, %v556
  %v573 = vld [vmem:[%s1 + $0x100] sm:$0xff]
  %v574 = vld [vmem:[%s1 + $0x108] sm:$0xff]
  %v575 = vld [vmem:[%s1 + $0x110] sm:$0xff]
  %v576 = vld [vmem:[%s1 + $0x118] sm:$0xff]
  %v577 = vld [vmem:[%s1 + $0x120] sm:$0xff]
  %v578 = vld [vmem:[%s1 + $0x128] sm:$0xff]
  %v579 = vld [vmem:[%s1 + $0x130] sm:$0xff]
  %v580 = vld [vmem:[%s1 + $0x138] sm:$0xff]
  %v581 = vld [vmem:[%s1 + $0x140] sm:$0xff]
  %v582 = vld [vmem:[%s1 + $0x148] sm:$0xff]
  %v583 = vld [vmem:[%s1 + $0x150] sm:$0xff]
  %v584 = vld [vmem:[%s1 + $0x158] sm:$0xff]
  %v585 = vld [vmem:[%s1 + $0x160] sm:$0xff]
  %v586 = vld [vmem:[%s1 + $0x168] sm:$0xff]
  %v587 = vld [vmem:[%s1 + $0x170] sm:$0xff]
  %v588 = vld [vmem:[%s1 + $0x178] sm:$0xff]
  %v589 = vld [vmem:[%s1 + $0x416] sm:$0x1]
  %v590 = vperm.slane %v589, 0
  %591 = vmatpush.msra.mxu0 %v588
  %592 = vmatpush.msra.mxu0 %v587
  %593 = vmatpush.msra.mxu0 %v586
  %594 = vmatpush.msra.mxu0 %v585
  %595 = vmatpush.msra.mxu0 %v584
  %596 = vmatpush.msra.mxu0 %v583
  %597 = vmatpush.msra.mxu0 %v582
  %598 = vmatpush.msra.mxu0 %v581
  %599 = vmatpush.msra.mxu0 %v580
  %600 = vmatpush.msra.mxu0 %v579
  %601 = vmatpush.msra.mxu0 %v578
  %602 = vmatpush.msra.mxu0 %v577
  %603 = vmatpush.msra.mxu0 %v576
  %604 = vmatpush.msra.mxu0 %v575
  %605 = vmatpush.msra.mxu0 %v574
  %606 = vmatpush.msra.mxu0 %v573
  %607 = vmatmul.f32.gmra.mxu0 %v557
  %v608 = vpop.f32.mrf.mxu0
  %v609 = vadd.f32 %v590, %v608
  %610 = vmatmul.f32.gmra.mxu0 %v558
  %v611 = vpop.f32.mrf.mxu0
  %v612 = vadd.f32 %v590, %v611
  %613 = vmatmul.f32.gmra.mxu0 %v559
  %v614 = vpop.f32.mrf.mxu0
  %v615 = vadd.f32 %v590, %v614
  %616 = vmatmul.f32.gmra.mxu0 %v560
  %v617 = vpop.f32.mrf.mxu0
  %v618 = vadd.f32 %v590, %v617
  %619 = vmatmul.f32.gmra.mxu0 %v561
  %v620 = vpop.f32.mrf.mxu0
  %v621 = vadd.f32 %v590, %v620
  %622 = vmatmul.f32.gmra.mxu0 %v562
  %v623 = vpop.f32.mrf.mxu0
  %v624 = vadd.f32 %v590, %v623
  %625 = vmatmul.f32.gmra.mxu0 %v563
  %v626 = vpop.f32.mrf.mxu0
  %v627 = vadd.f32 %v590, %v626
  %628 = vmatmul.f32.gmra.mxu0 %v564
  %v629 = vpop.f32.mrf.mxu0
  %v630 = vadd.f32 %v590, %v629
  %631 = vmatmul.f32.gmra.mxu0 %v565
  %v632 = vpop.f32.mrf.mxu0
  %v633 = vadd.f32 %v590, %v632
  %634 = vmatmul.f32.gmra.mxu0 %v566
  %v635 = vpop.f32.mrf.mxu0
  %v636 = vadd.f32 %v590, %v635
  %637 = vmatmul.f32.gmra.mxu0 %v567
  %v638 = vpop.f32.mrf.mxu0
  %v639 = vadd.f32 %v590, %v638
  %640 = vmatmul.f32.gmra.mxu0 %v568
  %v641 = vpop.f32.mrf.mxu0
  %v642 = vadd.f32 %v590, %v641
  %643 = vmatmul.f32.gmra.mxu0 %v569
  %v644 = vpop.f32.mrf.mxu0
  %v645 = vadd.f32 %v590, %v644
  %646 = vmatmul.f32.gmra.mxu0 %v570
  %v647 = vpop.f32.mrf.mxu0
  %v648 = vadd.f32 %v590, %v647
  %649 = vmatmul.f32.gmra.mxu0 %v571
  %v650 = vpop.f32.mrf.mxu0
  %v651 = vadd.f32 %v590, %v650
  %652 = vmatmul.f32.gmra.mxu0 %v572
  %v653 = vpop.f32.mrf.mxu0
  %v654 = vadd.f32 %v590, %v653
  %655 = vdwg.mxu0
  %v656 = vadd.f32 %v609, %v612
  %v657 = vadd.f32 %v656, %v615
  %v658 = vadd.f32 %v657, %v618
  %v659 = vadd.f32 %v658, %v621
  %v660 = vadd.f32 %v659, %v624
  %v661 = vadd.f32 %v660, %v627
  %v662 = vadd.f32 %v661, %v630
  %v663 = vadd.f32 %v662, %v633
  %v664 = vadd.f32 %v663, %v636
  %v665 = vadd.f32 %v664, %v639
  %v666 = vadd.f32 %v665, %v642
  %v667 = vadd.f32 %v666, %v645
  %v668 = vadd.f32 %v667, %v648
  %v669 = vadd.f32 %v668, %v651
  %v670 = vadd.f32 %v669, %v654
  %v671 = vrot.slane %v670, 4
  %v672 = vadd.f32 %v670, %v671
  %v673 = vrot.slane %v672, 2
  %v674 = vadd.f32 %v672, %v673
  %v675 = vrot.slane %v674, 1
  %v676 = vadd.f32 %v674, %v675
  %v677 = vmul.f32 %v676, 0.0078125
  %v678 = vmul.f32 %v609, %v609
  %v679 = vmul.f32 %v612, %v612
  %v680 = vmul.f32 %v615, %v615
  %v681 = vmul.f32 %v618, %v618
  %v682 = vmul.f32 %v621, %v621
  %v683 = vmul.f32 %v624, %v624
  %v684 = vmul.f32 %v627, %v627
  %v685 = vmul.f32 %v630, %v630
  %v686 = vmul.f32 %v633, %v633
  %v687 = vmul.f32 %v636, %v636
  %v688 = vmul.f32 %v639, %v639
  %v689 = vmul.f32 %v642, %v642
  %v690 = vmul.f32 %v645, %v645
  %v691 = vmul.f32 %v648, %v648
  %v692 = vmul.f32 %v651, %v651
  %v693 = vmul.f32 %v654, %v654
  %v694 = vadd.f32 %v678, %v679
  %v695 = vadd.f32 %v694, %v680
  %v696 = vadd.f32 %v695, %v681
  %v697 = vadd.f32 %v696, %v682
  %v698 = vadd.f32 %v697, %v683
  %v699 = vadd.f32 %v698, %v684
  %v700 = vadd.f32 %v699, %v685
  %v701 = vadd.f32 %v700, %v686
  %v702 = vadd.f32 %v701, %v687
  %v703 = vadd.f32 %v702, %v688
  %v704 = vadd.f32 %v703, %v689
  %v705 = vadd.f32 %v704, %v690
  %v706 = vadd.f32 %v705, %v691
  %v707 = vadd.f32 %v706, %v692
  %v708 = vadd.f32 %v707, %v693
  %v709 = vrot.slane %v708, 4
  %v710 = vadd.f32 %v708, %v709
  %v711 = vrot.slane %v710, 2
  %v712 = vadd.f32 %v710, %v711
  %v713 = vrot.slane %v712, 1
  %v714 = vadd.f32 %v712, %v713
  %v715 = vmul.f32 %v714, 0.0078125
  %v716 = vmul.f32 %v677, %v677
  %v717 = vsub.f32 %v715, %v716
  %v718 = vmax.f32 %v717, 0.0
  %v719 = vld [vmem:[%s1 + $0x417] sm:$0x1]
  %v720 = vsub.f32 %v609, %v677
  %v721 = vsub.f32 %v612, %v677
  %v722 = vsub.f32 %v615, %v677
  %v723 = vsub.f32 %v618, %v677
  %v724 = vsub.f32 %v621, %v677
  %v725 = vsub.f32 %v624, %v677
  %v726 = vsub.f32 %v627, %v677
  %v727 = vsub.f32 %v630, %v677
  %v728 = vsub.f32 %v633, %v677
  %v729 = vsub.f32 %v636, %v677
  %v730 = vsub.f32 %v639, %v677
  %v731 = vsub.f32 %v642, %v677
  %v732 = vsub.f32 %v645, %v677
  %v733 = vsub.f32 %v648, %v677
  %v734 = vsub.f32 %v651, %v677
  %v735 = vsub.f32 %v654, %v677
  %v736 = vadd.f32 %v718, 1e-05
  %v737 = vrsqrt.pop %v736
  %v738 = vmul.f32 %v737, %v736
  %v739 = vmul.f32 %v738, %v737
  %v740 = vmul.f32 0.5, %v739
  %v741 = vsub.f32 1.5, %v740
  %v742 = vmul.f32 %v737, %v741
  %vm743 = vweird.f32 %v736
  %vm744 = vweird.f32 %v737
  %vm745 = vmor %vm743, %vm744
  %v746 = vsel %vm745, %v737, %v742
  %v747 = vmul.f32 %v720, %v746
  %v748 = vmul.f32 %v721, %v746
  %v749 = vmul.f32 %v722, %v746
  %v750 = vmul.f32 %v723, %v746
  %v751 = vmul.f32 %v724, %v746
  %v752 = vmul.f32 %v725, %v746
  %v753 = vmul.f32 %v726, %v746
  %v754 = vmul.f32 %v727, %v746
  %v755 = vmul.f32 %v728, %v746
  %v756 = vmul.f32 %v729, %v746
  %v757 = vmul.f32 %v730, %v746
  %v758 = vmul.f32 %v731, %v746
  %v759 = vmul.f32 %v732, %v746
  %v760 = vmul.f32 %v733, %v746
  %v761 = vmul.f32 %v734, %v746
  %v762 = vmul.f32 %v735, %v746
  %v763 = vperm.slane %v719, 0
  %v764 = vmul.f32 %v763, %v747
  %v765 = vmul.f32 %v763, %v748
  %v766 = vmul.f32 %v763, %v749
  %v767 = vmul.f32 %v763, %v750
  %v768 = vmul.f32 %v763, %v751
  %v769 = vmul.f32 %v763, %v752
  %v770 = vmul.f32 %v763, %v753
  %v771 = vmul.f32 %v763, %v754
  %v772 = vmul.f32 %v763, %v755
  %v773 = vmul.f32 %v763, %v756
  %v774 = vmul.f32 %v763, %v757
  %v775 = vmul.f32 %v763, %v758
  %v776 = vmul.f32 %v763, %v759
  %v777 = vmul.f32 %v763, %v760
  %v778 = vmul.f32 %v763, %v761
  %v779 = vmul.f32 %v763, %v762
  %v780 = vld [vmem:[%s1 + $0x418] sm:$0x1]
  %v781 = vperm.slane %v780, 0
  %v782 = vadd.f32 %v764, %v781
  %v783 = vadd.f32 %v765, %v781
  %v784 = vadd.f32 %v766, %v781
  %v785 = vadd.f32 %v767, %v781
  %v786 = vadd.f32 %v768, %v781
  %v787 = vadd.f32 %v769, %v781
  %v788 = vadd.f32 %v770, %v781
  %v789 = vadd.f32 %v771, %v781
  %v790 = vadd.f32 %v772, %v781
  %v791 = vadd.f32 %v773, %v781
  %v792 = vadd.f32 %v774, %v781
  %v793 = vadd.f32 %v775, %v781
  %v794 = vadd.f32 %v776, %v781
  %v795 = vadd.f32 %v777, %v781
  %v796 = vadd.f32 %v778, %v781
  %v797 = vadd.f32 %v779, %v781
  %vm798 = vcmp.gt.f32.partialorder %v782, 0.0
  %vm799 = vcmp.gt.f32.partialorder %v783, 0.0
  %vm800 = vcmp.gt.f32.partialorder %v784, 0.0
  %vm801 = vcmp.gt.f32.partialorder %v785, 0.0
  %vm802 = vcmp.gt.f32.partialorder %v786, 0.0
  %vm803 = vcmp.gt.f32.partialorder %v787, 0.0
  %vm804 = vcmp.gt.f32.partialorder %v788, 0.0
  %vm805 = vcmp.gt.f32.partialorder %v789, 0.0
  %vm806 = vcmp.gt.f32.partialorder %v790, 0.0
  %vm807 = vcmp.gt.f32.partialorder %v791, 0.0
  %vm808 = vcmp.gt.f32.partialorder %v792, 0.0
  %vm809 = vcmp.gt.f32.partialorder %v793, 0.0
  %vm810 = vcmp.gt.f32.partialorder %v794, 0.0
  %vm811 = vcmp.gt.f32.partialorder %v795, 0.0
  %vm812 = vcmp.gt.f32.partialorder %v796, 0.0
  %vm813 = vcmp.gt.f32.partialorder %v797, 0.0
  %v814 = vmul.f32 %v782, 0.01
  %v815 = vmul.f32 %v783, 0.01
  %v816 = vmul.f32 %v784, 0.01
  %v817 = vmul.f32 %v785, 0.01
  %v818 = vmul.f32 %v786, 0.01
  %v819 = vmul.f32 %v787, 0.01
  %v820 = vmul.f32 %v788, 0.01
  %v821 = vmul.f32 %v789, 0.01
  %v822 = vmul.f32 %v790, 0.01
  %v823 = vmul.f32 %v791, 0.01
  %v824 = vmul.f32 %v792, 0.01
  %v825 = vmul.f32 %v793, 0.01
  %v826 = vmul.f32 %v794, 0.01
  %v827 = vmul.f32 %v795, 0.01
  %v828 = vmul.f32 %v796, 0.01
  %v829 = vmul.f32 %v797, 0.01
  %v830 = vsel %vm798, %v782, %v814
  %v831 = vsel %vm799, %v783, %v815
  %v832 = vsel %vm800, %v784, %v816
  %v833 = vsel %vm801, %v785, %v817
  %v834 = vsel %vm802, %v786, %v818
  %v835 = vsel %vm803, %v787, %v819
  %v836 = vsel %vm804, %v788, %v820
  %v837 = vsel %vm805, %v789, %v821
  %v838 = vsel %vm806, %v790, %v822
  %v839 = vsel %vm807, %v791, %v823
  %v840 = vsel %vm808, %v792, %v824
  %v841 = vsel %vm809, %v793, %v825
  %v842 = vsel %vm810, %v794, %v826
  %v843 = vsel %vm811, %v795, %v827
  %v844 = vsel %vm812, %v796, %v828
  %v845 = vsel %vm813, %v797, %v829
  %v846 = vld [vmem:[%s1 + $0x180] sm:$0xff]
  %v847 = vld [vmem:[%s1 + $0x188] sm:$0xff]
  %v848 = vld [vmem:[%s1 + $0x190] sm:$0xff]
  %v849 = vld [vmem:[%s1 + $0x198] sm:$0xff]
  %v850 = vld [vmem:[%s1 + $0x1a0] sm:$0xff]
  %v851 = vld [vmem:[%s1 + $0x1a8] sm:$0xff]
  %v852 = vld [vmem:[%s1 + $0x1b0] sm:$0xff]
  %v853 = vld [vmem:[%s1 + $0x1b8] sm:$0xff]
  %v854 = vld [vmem:[%s1 + $0x1c0] sm:$0xff]
  %v855 = vld [vmem:[%s1 + $0x1c8] sm:$0xff]
  %v856 = vld [vmem:[%s1 + $0x1d0] sm:$0xff]
  %v857 = vld [vmem:[%s1 + $0x1d8] sm:$0xff]
  %v858 = vld [vmem:[%s1 + $0x1e0] sm:$0xff]
  %v859 = vld [vmem:[%s1 + $0x1e8] sm:$0xff]
  %v860 = vld [vmem:[%s1 + $0x1f0] sm:$0xff]
  %v861 = vld [vmem:[%s1 + $0x1f8] sm:$0xff]
  %v862 = vld [vmem:[%s1 + $0x419] sm:$0x1]
  %v863 = vperm.slane %v862, 0
  %864 = vmatpush.msra.mxu0 %v861
  %865 = vmatpush.msra.mxu0 %v860
  %866 = vmatpush.msra.mxu0 %v859
  %867 = vmatpush.msra.mxu0 %v858
  %868 = vmatpush.msra.mxu0 %v857
  %869 = vmatpush.msra.mxu0 %v856
  %870 = vmatpush.msra.mxu0 %v855
  %871 = vmatpush.msra.mxu0 %v854
  %872 = vmatpush.msra.mxu0 %v853
  %873 = vmatpush.msra.mxu0 %v852
  %874 = vmatpush.msra.mxu0 %v851
  %875 = vmatpush.msra.mxu0 %v850
  %876 = vmatpush.msra.mxu0 %v849
  %877 = vmatpush.msra.mxu0 %v848
  %878 = vmatpush.msra.mxu0 %v847
  %879 = vmatpush.msra.mxu0 %v846
  %880 = vmatmul.f32.gmra.mxu0 %v830
  %v881 = vpop.f32.mrf.mxu0
  %v882 = vadd.f32 %v863, %v881
  %883 = vmatmul.f32.gmra.mxu0 %v831
  %v884 = vpop.f32.mrf.mxu0
  %v885 = vadd.f32 %v863, %v884
  %886 = vmatmul.f32.gmra.mxu0 %v832
  %v887 = vpop.f32.mrf.mxu0
  %v888 = vadd.f32 %v863, %v887
  %889 = vmatmul.f32.gmra.mxu0 %v833
  %v890 = vpop.f32.mrf.mxu0
  %v891 = vadd.f32 %v863, %v890
  %892 = vmatmul.f32.gmra.mxu0 %v834
  %v893 = vpop.f32.mrf.mxu0
  %v894 = vadd.f32 %v863, %v893
  %895 = vmatmul.f32.gmra.mxu0 %v835
  %v896 = vpop.f32.mrf.mxu0
  %v897 = vadd.f32 %v863, %v896
  %898 = vmatmul.f32.gmra.mxu0 %v836
  %v899 = vpop.f32.mrf.mxu0
  %v900 = vadd.f32 %v863, %v899
  %901 = vmatmul.f32.gmra.mxu0 %v837
  %v902 = vpop.f32.mrf.mxu0
  %v903 = vadd.f32 %v863, %v902
  %904 = vmatmul.f32.gmra.mxu0 %v838
  %v905 = vpop.f32.mrf.mxu0
  %v906 = vadd.f32 %v863, %v905
  %907 = vmatmul.f32.gmra.mxu0 %v839
  %v908 = vpop.f32.mrf.mxu0
  %v909 = vadd.f32 %v863, %v908
  %910 = vmatmul.f32.gmra.mxu0 %v840
  %v911 = vpop.f32.mrf.mxu0
  %v912 = vadd.f32 %v863, %v911
  %913 = vmatmul.f32.gmra.mxu0 %v841
  %v914 = vpop.f32.mrf.mxu0
  %v915 = vadd.f32 %v863, %v914
  %916 = vmatmul.f32.gmra.mxu0 %v842
  %v917 = vpop.f32.mrf.mxu0
  %v918 = vadd.f32 %v863, %v917
  %919 = vmatmul.f32.gmra.mxu0 %v843
  %v920 = vpop.f32.mrf.mxu0
  %v921 = vadd.f32 %v863, %v920
  %922 = vmatmul.f32.gmra.mxu0 %v844
  %v923 = vpop.f32.mrf.mxu0
  %v924 = vadd.f32 %v863, %v923
  %925 = vmatmul.f32.gmra.mxu0 %v845
  %v926 = vpop.f32.mrf.mxu0
  %v927 = vadd.f32 %v863, %v926
  %928 = vdwg.mxu0
  %945 = vrot.lane.b32.xlu0 %v882, 96
  %v946 = vpop.permute.xlu0 %945
  %947 = vrot.lane.b32.xlu0 %v885, 96
  %v948 = vpop.permute.xlu0 %947
  %949 = vrot.lane.b32.xlu0 %v888, 96
  %v950 = vpop.permute.xlu0 %949
  %951 = vrot.lane.b32.xlu0 %v891, 96
  %v952 = vpop.permute.xlu0 %951
  %953 = vrot.lane.b32.xlu0 %v894, 96
  %v954 = vpop.permute.xlu0 %953
  %955 = vrot.lane.b32.xlu0 %v897, 96
  %v956 = vpop.permute.xlu0 %955
  %957 = vrot.lane.b32.xlu0 %v900, 96
  %v958 = vpop.permute.xlu0 %957
  %959 = vrot.lane.b32.xlu0 %v903, 96
  %v960 = vpop.permute.xlu0 %959
  %961 = vrot.lane.b32.xlu0 %v906, 96
  %v962 = vpop.permute.xlu0 %961
  %963 = vrot.lane.b32.xlu0 %v909, 96
  %v964 = vpop.permute.xlu0 %963
  %965 = vrot.lane.b32.xlu0 %v912, 96
  %v966 = vpop.permute.xlu0 %965
  %967 = vrot.lane.b32.xlu0 %v915, 96
  %v968 = vpop.permute.xlu0 %967
  %969 = vrot.lane.b32.xlu0 %v918, 96
  %v970 = vpop.permute.xlu0 %969
  %971 = vrot.lane.b32.xlu0 %v921, 96
  %v972 = vpop.permute.xlu0 %971
  %973 = vrot.lane.b32.xlu0 %v924, 96
  %v974 = vpop.permute.xlu0 %973
  %975 = vrot.lane.b32.xlu0 %v927, 96
  %v976 = vpop.permute.xlu0 %975
  %v993 = vadd.f32 %v882, %v946
  %v994 = vadd.f32 %v885, %v948
  %v995 = vadd.f32 %v888, %v950
  %v996 = vadd.f32 %v891, %v952
  %v997 = vadd.f32 %v894, %v954
  %v998 = vadd.f32 %v897, %v956
  %v999 = vadd.f32 %v900, %v958
  %v1000 = vadd.f32 %v903, %v960
  %v1001 = vadd.f32 %v906, %v962
  %v1002 = vadd.f32 %v909, %v964
  %v1003 = vadd.f32 %v912, %v966
  %v1004 = vadd.f32 %v915, %v968
  %v1005 = vadd.f32 %v918, %v970
  %v1006 = vadd.f32 %v921, %v972
  %v1007 = vadd.f32 %v924, %v974
  %v1008 = vadd.f32 %v927, %v976
  %v1009 = vmul.f32 %v993, 0.5
  %v1010 = vmul.f32 %v994, 0.5
  %v1011 = vmul.f32 %v995, 0.5
  %v1012 = vmul.f32 %v996, 0.5
  %v1013 = vmul.f32 %v997, 0.5
  %v1014 = vmul.f32 %v998, 0.5
  %v1015 = vmul.f32 %v999, 0.5
  %v1016 = vmul.f32 %v1000, 0.5
  %v1017 = vmul.f32 %v1001, 0.5
  %v1018 = vmul.f32 %v1002, 0.5
  %v1019 = vmul.f32 %v1003, 0.5
  %v1020 = vmul.f32 %v1004, 0.5
  %v1021 = vmul.f32 %v1005, 0.5
  %v1022 = vmul.f32 %v1006, 0.5
  %v1023 = vmul.f32 %v1007, 0.5
  %v1024 = vmul.f32 %v1008, 0.5
  %v1025 = vmul.f32 %v1009, 0.5
  %v1026 = vmul.f32 %v1010, 0.5
  %v1027 = vmul.f32 %v1011, 0.5
  %v1028 = vmul.f32 %v1012, 0.5
  %v1029 = vmul.f32 %v1013, 0.5
  %v1030 = vmul.f32 %v1014, 0.5
  %v1031 = vmul.f32 %v1015, 0.5
  %v1032 = vmul.f32 %v1016, 0.5
  %v1033 = vmul.f32 %v1017, 0.5
  %v1034 = vmul.f32 %v1018, 0.5
  %v1035 = vmul.f32 %v1019, 0.5
  %v1036 = vmul.f32 %v1020, 0.5
  %v1037 = vmul.f32 %v1021, 0.5
  %v1038 = vmul.f32 %v1022, 0.5
  %v1039 = vmul.f32 %v1023, 0.5
  %v1040 = vmul.f32 %v1024, 0.5
  %v1041 = vmul.f32 %v1025, 1.442695
  %v1042 = vpow.pop %v1041
  %v1043 = vmul.f32 %v1026, 1.442695
  %v1044 = vpow.pop %v1043
  %v1045 = vmul.f32 %v1027, 1.442695
  %v1046 = vpow.pop %v1045
  %v1047 = vmul.f32 %v1028, 1.442695
  %v1048 = vpow.pop %v1047
  %v1049 = vmul.f32 %v1029, 1.442695
  %v1050 = vpow.pop %v1049
  %v1051 = vmul.f32 %v1030, 1.442695
  %v1052 = vpow.pop %v1051
  %v1053 = vmul.f32 %v1031, 1.442695
  %v1054 = vpow.pop %v1053
  %v1055 = vmul.f32 %v1032, 1.442695
  %v1056 = vpow.pop %v1055
  %v1057 = vmul.f32 %v1033, 1.442695
  %v1058 = vpow.pop %v1057
  %v1059 = vmul.f32 %v1034, 1.442695
  %v1060 = vpow.pop %v1059
  %v1061 = vmul.f32 %v1035, 1.442695
  %v1062 = vpow.pop %v1061
  %v1063 = vmul.f32 %v1036, 1.442695
  %v1064 = vpow.pop %v1063
  %v1065 = vmul.f32 %v1037, 1.442695
  %v1066 = vpow.pop %v1065
  %v1067 = vmul.f32 %v1038, 1.442695
  %v1068 = vpow.pop %v1067
  %v1069 = vmul.f32 %v1039, 1.442695
  %v1070 = vpow.pop %v1069
  %v1071 = vmul.f32 %v1040, 1.442695
  %v1072 = vpow.pop %v1071
  %1089 = vrot.lane.b32.xlu0 %v1042, 88
  %v1090 = vpop.permute.xlu0 %1089
  %1091 = vrot.lane.b32.xlu0 %v1044, 88
  %v1092 = vpop.permute.xlu0 %1091
  %1093 = vrot.lane.b32.xlu0 %v1046, 88
  %v1094 = vpop.permute.xlu0 %1093
  %1095 = vrot.lane.b32.xlu0 %v1048, 88
  %v1096 = vpop.permute.xlu0 %1095
  %1097 = vrot.lane.b32.xlu0 %v1050, 88
  %v1098 = vpop.permute.xlu0 %1097
  %1099 = vrot.lane.b32.xlu0 %v1052, 88
  %v1100 = vpop.permute.xlu0 %1099
  %1101 = vrot.lane.b32.xlu0 %v1054, 88
  %v1102 = vpop.permute.xlu0 %1101
  %1103 = vrot.lane.b32.xlu0 %v1056, 88
  %v1104 = vpop.permute.xlu0 %1103
  %1105 = vrot.lane.b32.xlu0 %v1058, 88
  %v1106 = vpop.permute.xlu0 %1105
  %1107 = vrot.lane.b32.xlu0 %v1060, 88
  %v1108 = vpop.permute.xlu0 %1107
  %1109 = vrot.lane.b32.xlu0 %v1062, 88
  %v1110 = vpop.permute.xlu0 %1109
  %1111 = vrot.lane.b32.xlu0 %v1064, 88
  %v1112 = vpop.permute.xlu0 %1111
  %1113 = vrot.lane.b32.xlu0 %v1066, 88
  %v1114 = vpop.permute.xlu0 %1113
  %1115 = vrot.lane.b32.xlu0 %v1068, 88
  %v1116 = vpop.permute.xlu0 %1115
  %1117 = vrot.lane.b32.xlu0 %v1070, 88
  %v1118 = vpop.permute.xlu0 %1117
  %1119 = vrot.lane.b32.xlu0 %v1072, 88
  %v1120 = vpop.permute.xlu0 %1119
  %v1137 = vmul.f32 %v11, %v1090
  %v1138 = vmul.f32 %v12, %v1092
  %v1139 = vmul.f32 %v13, %v1094
  %v1140 = vmul.f32 %v14, %v1096
  %v1141 = vmul.f32 %v15, %v1098
  %v1142 = vmul.f32 %v16, %v1100
  %v1143 = vmul.f32 %v17, %v1102
  %v1144 = vmul.f32 %v18, %v1104
  %v1145 = vmul.f32 %v19, %v1106
  %v1146 = vmul.f32 %v20, %v1108
  %v1147 = vmul.f32 %v21, %v1110
  %v1148 = vmul.f32 %v22, %v1112
  %v1149 = vmul.f32 %v23, %v1114
  %v1150 = vmul.f32 %v24, %v1116
  %v1151 = vmul.f32 %v25, %v1118
  %v1152 = vmul.f32 %v26, %v1120
  %1169 = vrot.lane.b32.xlu0 %v1009, 104
  %v1170 = vpop.permute.xlu0 %1169
  %1171 = vrot.lane.b32.xlu0 %v1010, 104
  %v1172 = vpop.permute.xlu0 %1171
  %1173 = vrot.lane.b32.xlu0 %v1011, 104
  %v1174 = vpop.permute.xlu0 %1173
  %1175 = vrot.lane.b32.xlu0 %v1012, 104
  %v1176 = vpop.permute.xlu0 %1175
  %1177 = vrot.lane.b32.xlu0 %v1013, 104
  %v1178 = vpop.permute.xlu0 %1177
  %1179 = vrot.lane.b32.xlu0 %v1014, 104
  %v1180 = vpop.permute.xlu0 %1179
  %1181 = vrot.lane.b32.xlu0 %v1015, 104
  %v1182 = vpop.permute.xlu0 %1181
  %1183 = vrot.lane.b32.xlu0 %v1016, 104
  %v1184 = vpop.permute.xlu0 %1183
  %1185 = vrot.lane.b32.xlu0 %v1017, 104
  %v1186 = vpop.permute.xlu0 %1185
  %1187 = vrot.lane.b32.xlu0 %v1018, 104
  %v1188 = vpop.permute.xlu0 %1187
  %1189 = vrot.lane.b32.xlu0 %v1019, 104
  %v1190 = vpop.permute.xlu0 %1189
  %1191 = vrot.lane.b32.xlu0 %v1020, 104
  %v1192 = vpop.permute.xlu0 %1191
  %1193 = vrot.lane.b32.xlu0 %v1021, 104
  %v1194 = vpop.permute.xlu0 %1193
  %1195 = vrot.lane.b32.xlu0 %v1022, 104
  %v1196 = vpop.permute.xlu0 %1195
  %1197 = vrot.lane.b32.xlu0 %v1023, 104
  %v1198 = vpop.permute.xlu0 %1197
  %1199 = vrot.lane.b32.xlu0 %v1024, 104
  %v1200 = vpop.permute.xlu0 %1199
  %v1217 = vadd.f32 %v1137, %v1170
  %v1218 = vadd.f32 %v1138, %v1172
  %v1219 = vadd.f32 %v1139, %v1174
  %v1220 = vadd.f32 %v1140, %v1176
  %v1221 = vadd.f32 %v1141, %v1178
  %v1222 = vadd.f32 %v1142, %v1180
  %v1223 = vadd.f32 %v1143, %v1182
  %v1224 = vadd.f32 %v1144, %v1184
  %v1225 = vadd.f32 %v1145, %v1186
  %v1226 = vadd.f32 %v1146, %v1188
  %v1227 = vadd.f32 %v1147, %v1190
  %v1228 = vadd.f32 %v1148, %v1192
  %v1229 = vadd.f32 %v1149, %v1194
  %v1230 = vadd.f32 %v1150, %v1196
  %v1231 = vadd.f32 %v1151, %v1198
  %v1232 = vadd.f32 %v1152, %v1200
  %v1233 = vld [vmem:[%s1 + $0x200] sm:$0xff]
  %v1234 = vld [vmem:[%s1 + $0x208] sm:$0xff]
  %v1235 = vld [vmem:[%s1 + $0x210] sm:$0xff]
  %v1236 = vld [vmem:[%s1 + $0x218] sm:$0xff]
  %v1237 = vld [vmem:[%s1 + $0x220] sm:$0xff]
  %v1238 = vld [vmem:[%s1 + $0x228] sm:$0xff]
  %v1239 = vld [vmem:[%s1 + $0x230] sm:$0xff]
  %v1240 = vld [vmem:[%s1 + $0x238] sm:$0xff]
  %v1241 = vld [vmem:[%s1 + $0x240] sm:$0xff]
  %v1242 = vld [vmem:[%s1 + $0x248] sm:$0xff]
  %v1243 = vld [vmem:[%s1 + $0x250] sm:$0xff]
  %v1244 = vld [vmem:[%s1 + $0x258] sm:$0xff]
  %v1245 = vld [vmem:[%s1 + $0x260] sm:$0xff]
  %v1246 = vld [vmem:[%s1 + $0x268] sm:$0xff]
  %v1247 = vld [vmem:[%s1 + $0x270] sm:$0xff]
  %v1248 = vld [vmem:[%s1 + $0x278] sm:$0xff]
  %v1249 = vld [vmem:[%s1 + $0x280] sm:$0xff]
  %v1250 = vld [vmem:[%s1 + $0x288] sm:$0xff]
  %1251 = vmatpush.msra.mxu0 %v1250
  %1252 = vmatpush.msra.mxu0 %v1249
  %1253 = vmatpush.msra.mxu0 %v1248
  %1254 = vmatpush.msra.mxu0 %v1247
  %1255 = vmatpush.msra.mxu0 %v1246
  %1256 = vmatpush.msra.mxu0 %v1245
  %1257 = vmatpush.msra.mxu0 %v1244
  %1258 = vmatpush.msra.mxu0 %v1243
  %1259 = vmatpush.msra.mxu0 %v1242
  %1260 = vmatpush.msra.mxu0 %v1241
  %1261 = vmatpush.msra.mxu0 %v1240
  %1262 = vmatpush.msra.mxu0 %v1239
  %1263 = vmatpush.msra.mxu0 %v1238
  %1264 = vmatpush.msra.mxu0 %v1237
  %1265 = vmatpush.msra.mxu0 %v1236
  %1266 = vmatpush.msra.mxu0 %v1235
  %1267 = vmatmul.f32.gmra.mxu0 %v11
  %v1268 = vpop.f32.mrf.mxu0
  %v1269 = vadd.f32 0.0, %v1268
  %1270 = vmatmul.f32.gmra.mxu0 %v12
  %v1271 = vpop.f32.mrf.mxu0
  %v1272 = vadd.f32 0.0, %v1271
  %1273 = vmatmul.f32.gmra.mxu0 %v13
  %v1274 = vpop.f32.mrf.mxu0
  %v1275 = vadd.f32 0.0, %v1274
  %1276 = vmatmul.f32.gmra.mxu0 %v14
  %v1277 = vpop.f32.mrf.mxu0
  %v1278 = vadd.f32 0.0, %v1277
  %1279 = vmatmul.f32.gmra.mxu0 %v15
  %v1280 = vpop.f32.mrf.mxu0
  %v1281 = vadd.f32 0.0, %v1280
  %1282 = vmatmul.f32.gmra.mxu0 %v16
  %v1283 = vpop.f32.mrf.mxu0
  %v1284 = vadd.f32 0.0, %v1283
  %1285 = vmatmul.f32.gmra.mxu0 %v17
  %v1286 = vpop.f32.mrf.mxu0
  %v1287 = vadd.f32 0.0, %v1286
  %1288 = vmatmul.f32.gmra.mxu0 %v18
  %v1289 = vpop.f32.mrf.mxu0
  %v1290 = vadd.f32 0.0, %v1289
  %1291 = vmatmul.f32.gmra.mxu0 %v19
  %v1292 = vpop.f32.mrf.mxu0
  %v1293 = vadd.f32 0.0, %v1292
  %1294 = vmatmul.f32.gmra.mxu0 %v20
  %v1295 = vpop.f32.mrf.mxu0
  %v1296 = vadd.f32 0.0, %v1295
  %1297 = vmatmul.f32.gmra.mxu0 %v21
  %v1298 = vpop.f32.mrf.mxu0
  %v1299 = vadd.f32 0.0, %v1298
  %1300 = vmatmul.f32.gmra.mxu0 %v22
  %v1301 = vpop.f32.mrf.mxu0
  %v1302 = vadd.f32 0.0, %v1301
  %1303 = vmatmul.f32.gmra.mxu0 %v23
  %v1304 = vpop.f32.mrf.mxu0
  %v1305 = vadd.f32 0.0, %v1304
  %1306 = vmatmul.f32.gmra.mxu0 %v24
  %v1307 = vpop.f32.mrf.mxu0
  %v1308 = vadd.f32 0.0, %v1307
  %1309 = vmatmul.f32.gmra.mxu0 %v25
  %v1310 = vpop.f32.mrf.mxu0
  %v1311 = vadd.f32 0.0, %v1310
  %1312 = vmatmul.f32.gmra.mxu0 %v26
  %v1313 = vpop.f32.mrf.mxu0
  %v1314 = vadd.f32 0.0, %v1313
  %1315 = vdwg.mxu0
  %1332 = vrot.lane.b32.xlu0 %v1217, 24
  %v1333 = vpop.permute.xlu0 %1332
  %1334 = vrot.lane.b32.xlu0 %v1218, 24
  %v1335 = vpop.permute.xlu0 %1334
  %1336 = vrot.lane.b32.xlu0 %v1219, 24
  %v1337 = vpop.permute.xlu0 %1336
  %1338 = vrot.lane.b32.xlu0 %v1220, 24
  %v1339 = vpop.permute.xlu0 %1338
  %1340 = vrot.lane.b32.xlu0 %v1221, 24
  %v1341 = vpop.permute.xlu0 %1340
  %1342 = vrot.lane.b32.xlu0 %v1222, 24
  %v1343 = vpop.permute.xlu0 %1342
  %1344 = vrot.lane.b32.xlu0 %v1223, 24
  %v1345 = vpop.permute.xlu0 %1344
  %1346 = vrot.lane.b32.xlu0 %v1224, 24
  %v1347 = vpop.permute.xlu0 %1346
  %1348 = vrot.lane.b32.xlu0 %v1225, 24
  %v1349 = vpop.permute.xlu0 %1348
  %1350 = vrot.lane.b32.xlu0 %v1226, 24
  %v1351 = vpop.permute.xlu0 %1350
  %1352 = vrot.lane.b32.xlu0 %v1227, 24
  %v1353 = vpop.permute.xlu0 %1352
  %1354 = vrot.lane.b32.xlu0 %v1228, 24
  %v1355 = vpop.permute.xlu0 %1354
  %1356 = vrot.lane.b32.xlu0 %v1229, 24
  %v1357 = vpop.permute.xlu0 %1356
  %1358 = vrot.lane.b32.xlu0 %v1230, 24
  %v1359 = vpop.permute.xlu0 %1358
  %1360 = vrot.lane.b32.xlu0 %v1231, 24
  %v1361 = vpop.permute.xlu0 %1360
  %1362 = vrot.lane.b32.xlu0 %v1232, 24
  %v1363 = vpop.permute.xlu0 %1362
  %vm1364 = vcmask 130048
  %v1365 = vsel %vm1364, %v1333, 0
  %v1367 = vsel %vm1364, %v1335, 0
  %v1369 = vsel %vm1364, %v1337, 0
  %v1371 = vsel %vm1364, %v1339, 0
  %v1373 = vsel %vm1364, %v1341, 0
  %v1375 = vsel %vm1364, %v1343, 0
  %v1377 = vsel %vm1364, %v1345, 0
  %v1379 = vsel %vm1364, %v1347, 0
  %v1381 = vsel %vm1364, %v1349, 0
  %v1383 = vsel %vm1364, %v1351, 0
  %v1385 = vsel %vm1364, %v1353, 0
  %v1387 = vsel %vm1364, %v1355, 0
  %v1389 = vsel %vm1364, %v1357, 0
  %v1391 = vsel %vm1364, %v1359, 0
  %v1393 = vsel %vm1364, %v1361, 0
  %v1395 = vsel %vm1364, %v1363, 0
  %1397 = vmatpush.msra.mxu0 0.0
  %1398 = vmatpush.msra.mxu0 0.0
  %1399 = vmatpush.msra.mxu0 0.0
  %1400 = vmatpush.msra.mxu0 0.0
  %1401 = vmatpush.msra.mxu0 0.0
  %1402 = vmatpush.msra.mxu0 0.0
  %1403 = vmatpush.msra.mxu0 0.0
  %1404 = vmatpush.msra.mxu0 0.0
  %1405 = vmatpush.msra.mxu0 0.0
  %1406 = vmatpush.msra.mxu0 0.0
  %1407 = vmatpush.msra.mxu0 0.0
  %1408 = vmatpush.msra.mxu0 0.0
  %1409 = vmatpush.msra.mxu0 0.0
  %1410 = vmatpush.msra.mxu0 0.0
  %1411 = vmatpush.msra.mxu0 %v1234
  %1412 = vmatpush.msra.mxu0 %v1233
  %1413 = vmatmul.f32.gmra.mxu0 %v1365
  %v1414 = vpop.f32.mrf.mxu0
  %v1415 = vadd.f32 %v1269, %v1414
  %1416 = vmatmul.f32.gmra.mxu0 %v1367
  %v1417 = vpop.f32.mrf.mxu0
  %v1418 = vadd.f32 %v1272, %v1417
  %1419 = vmatmul.f32.gmra.mxu0 %v1369
  %v1420 = vpop.f32.mrf.mxu0
  %v1421 = vadd.f32 %v1275, %v1420
  %1422 = vmatmul.f32.gmra.mxu0 %v1371
  %v1423 = vpop.f32.mrf.mxu0
  %v1424 = vadd.f32 %v1278, %v1423
  %1425 = vmatmul.f32.gmra.mxu0 %v1373
  %v1426 = vpop.f32.mrf.mxu0
  %v1427 = vadd.f32 %v1281, %v1426
  %1428 = vmatmul.f32.gmra.mxu0 %v1375
  %v1429 = vpop.f32.mrf.mxu0
  %v1430 = vadd.f32 %v1284, %v1429
  %1431 = vmatmul.f32.gmra.mxu0 %v1377
  %v1432 = vpop.f32.mrf.mxu0
  %v1433 = vadd.f32 %v1287, %v1432
  %1434 = vmatmul.f32.gmra.mxu0 %v1379
  %v1435 = vpop.f32.mrf.mxu0
  %v1436 = vadd.f32 %v1290, %v1435
  %1437 = vmatmul.f32.gmra.mxu0 %v1381
  %v1438 = vpop.f32.mrf.mxu0
  %v1439 = vadd.f32 %v1293, %v1438
  %1440 = vmatmul.f32.gmra.mxu0 %v1383
  %v1441 = vpop.f32.mrf.mxu0
  %v1442 = vadd.f32 %v1296, %v1441
  %1443 = vmatmul.f32.gmra.mxu0 %v1385
  %v1444 = vpop.f32.mrf.mxu0
  %v1445 = vadd.f32 %v1299, %v1444
  %1446 = vmatmul.f32.gmra.mxu0 %v1387
  %v1447 = vpop.f32.mrf.mxu0
  %v1448 = vadd.f32 %v1302, %v1447
  %1449 = vmatmul.f32.gmra.mxu0 %v1389
  %v1450 = vpop.f32.mrf.mxu0
  %v1451 = vadd.f32 %v1305, %v1450
  %1452 = vmatmul.f32.gmra.mxu0 %v1391
  %v1453 = vpop.f32.mrf.mxu0
  %v1454 = vadd.f32 %v1308, %v1453
  %1455 = vmatmul.f32.gmra.mxu0 %v1393
  %v1456 = vpop.f32.mrf.mxu0
  %v1457 = vadd.f32 %v1311, %v1456
  %1458 = vmatmul.f32.gmra.mxu0 %v1395
  %v1459 = vpop.f32.mrf.mxu0
  %v1460 = vadd.f32 %v1314, %v1459
  %1461 = vdwg.mxu0
  %v1462 = vld [vmem:[%s1 + $0x41a] sm:$0x1]
  %v1463 = vperm.slane %v1462, 0
  %v1464 = vadd.f32 %v1415, %v1463
  %v1465 = vadd.f32 %v1418, %v1463
  %v1466 = vadd.f32 %v1421, %v1463
  %v1467 = vadd.f32 %v1424, %v1463
  %v1468 = vadd.f32 %v1427, %v1463
  %v1469 = vadd.f32 %v1430, %v1463
  %v1470 = vadd.f32 %v1433, %v1463
  %v1471 = vadd.f32 %v1436, %v1463
  %v1472 = vadd.f32 %v1439, %v1463
  %v1473 = vadd.f32 %v1442, %v1463
  %v1474 = vadd.f32 %v1445, %v1463
  %v1475 = vadd.f32 %v1448, %v1463
  %v1476 = vadd.f32 %v1451, %v1463
  %v1477 = vadd.f32 %v1454, %v1463
  %v1478 = vadd.f32 %v1457, %v1463
  %v1479 = vadd.f32 %v1460, %v1463
  %v1480 = vadd.f32 %v1464, %v1465
  %v1481 = vadd.f32 %v1480, %v1466
  %v1482 = vadd.f32 %v1481, %v1467
  %v1483 = vadd.f32 %v1482, %v1468
  %v1484 = vadd.f32 %v1483, %v1469
  %v1485 = vadd.f32 %v1484, %v1470
  %v1486 = vadd.f32 %v1485, %v1471
  %v1487 = vadd.f32 %v1486, %v1472
  %v1488 = vadd.f32 %v1487, %v1473
  %v1489 = vadd.f32 %v1488, %v1474
  %v1490 = vadd.f32 %v1489, %v1475
  %v1491 = vadd.f32 %v1490, %v1476
  %v1492 = vadd.f32 %v1491, %v1477
  %v1493 = vadd.f32 %v1492, %v1478
  %v1494 = vadd.f32 %v1493, %v1479
  %v1495 = vrot.slane %v1494, 4
  %v1496 = vadd.f32 %v1494, %v1495
  %v1497 = vrot.slane %v1496, 2
  %v1498 = vadd.f32 %v1496, %v1497
  %v1499 = vrot.slane %v1498, 1
  %v1500 = vadd.f32 %v1498, %v1499
  %v1501 = vmul.f32 %v1500, 0.0078125
  %v1502 = vmul.f32 %v1464, %v1464
  %v1503 = vmul.f32 %v1465, %v1465
  %v1504 = vmul.f32 %v1466, %v1466
  %v1505 = vmul.f32 %v1467, %v1467
  %v1506 = vmul.f32 %v1468, %v1468
  %v1507 = vmul.f32 %v1469, %v1469
  %v1508 = vmul.f32 %v1470, %v1470
  %v1509 = vmul.f32 %v1471, %v1471
  %v1510 = vmul.f32 %v1472, %v1472
  %v1511 = vmul.f32 %v1473, %v1473
  %v1512 = vmul.f32 %v1474, %v1474
  %v1513 = vmul.f32 %v1475, %v1475
  %v1514 = vmul.f32 %v1476, %v1476
  %v1515 = vmul.f32 %v1477, %v1477
  %v1516 = vmul.f32 %v1478, %v1478
  %v1517 = vmul.f32 %v1479, %v1479
  %v1518 = vadd.f32 %v1502, %v1503
  %v1519 = vadd.f32 %v1518, %v1504
  %v1520 = vadd.f32 %v1519, %v1505
  %v1521 = vadd.f32 %v1520, %v1506
  %v1522 = vadd.f32 %v1521, %v1507
  %v1523 = vadd.f32 %v1522, %v1508
  %v1524 = vadd.f32 %v1523, %v1509
  %v1525 = vadd.f32 %v1524, %v1510
  %v1526 = vadd.f32 %v1525, %v1511
  %v1527 = vadd.f32 %v1526, %v1512
  %v1528 = vadd.f32 %v1527, %v1513
  %v1529 = vadd.f32 %v1528, %v1514
  %v1530 = vadd.f32 %v1529, %v1515
  %v1531 = vadd.f32 %v1530, %v1516
  %v1532 = vadd.f32 %v1531, %v1517
  %v1533 = vrot.slane %v1532, 4
  %v1534 = vadd.f32 %v1532, %v1533
  %v1535 = vrot.slane %v1534, 2
  %v1536 = vadd.f32 %v1534, %v1535
  %v1537 = vrot.slane %v1536, 1
  %v1538 = vadd.f32 %v1536, %v1537
  %v1539 = vmul.f32 %v1538, 0.0078125
  %v1540 = vmul.f32 %v1501, %v1501
  %v1541 = vsub.f32 %v1539, %v1540
  %v1542 = vmax.f32 %v1541, 0.0
  %v1543 = vld [vmem:[%s1 + $0x41b] sm:$0x1]
  %v1544 = vsub.f32 %v1464, %v1501
  %v1545 = vsub.f32 %v1465, %v1501
  %v1546 = vsub.f32 %v1466, %v1501
  %v1547 = vsub.f32 %v1467, %v1501
  %v1548 = vsub.f32 %v1468, %v1501
  %v1549 = vsub.f32 %v1469, %v1501
  %v1550 = vsub.f32 %v1470, %v1501
  %v1551 = vsub.f32 %v1471, %v1501
  %v1552 = vsub.f32 %v1472, %v1501
  %v1553 = vsub.f32 %v1473, %v1501
  %v1554 = vsub.f32 %v1474, %v1501
  %v1555 = vsub.f32 %v1475, %v1501
  %v1556 = vsub.f32 %v1476, %v1501
  %v1557 = vsub.f32 %v1477, %v1501
  %v1558 = vsub.f32 %v1478, %v1501
  %v1559 = vsub.f32 %v1479, %v1501
  %v1560 = vadd.f32 %v1542, 1e-05
  %v1561 = vrsqrt.pop %v1560
  %v1562 = vmul.f32 %v1561, %v1560
  %v1563 = vmul.f32 %v1562, %v1561
  %v1564 = vmul.f32 0.5, %v1563
  %v1565 = vsub.f32 1.5, %v1564
  %v1566 = vmul.f32 %v1561, %v1565
  %vm1567 = vweird.f32 %v1560
  %vm1568 = vweird.f32 %v1561
  %vm1569 = vmor %vm1567, %vm1568
  %v1570 = vsel %vm1569, %v1561, %v1566
  %v1571 = vmul.f32 %v1544, %v1570
  %v1572 = vmul.f32 %v1545, %v1570
  %v1573 = vmul.f32 %v1546, %v1570
  %v1574 = vmul.f32 %v1547, %v1570
  %v1575 = vmul.f32 %v1548, %v1570
  %v1576 = vmul.f32 %v1549, %v1570
  %v1577 = vmul.f32 %v1550, %v1570
  %v1578 = vmul.f32 %v1551, %v1570
  %v1579 = vmul.f32 %v1552, %v1570
  %v1580 = vmul.f32 %v1553, %v1570
  %v1581 = vmul.f32 %v1554, %v1570
  %v1582 = vmul.f32 %v1555, %v1570
  %v1583 = vmul.f32 %v1556, %v1570
  %v1584 = vmul.f32 %v1557, %v1570
  %v1585 = vmul.f32 %v1558, %v1570
  %v1586 = vmul.f32 %v1559, %v1570
  %v1587 = vperm.slane %v1543, 0
  %v1588 = vmul.f32 %v1587, %v1571
  %v1589 = vmul.f32 %v1587, %v1572
  %v1590 = vmul.f32 %v1587, %v1573
  %v1591 = vmul.f32 %v1587, %v1574
  %v1592 = vmul.f32 %v1587, %v1575
  %v1593 = vmul.f32 %v1587, %v1576
  %v1594 = vmul.f32 %v1587, %v1577
  %v1595 = vmul.f32 %v1587, %v1578
  %v1596 = vmul.f32 %v1587, %v1579
  %v1597 = vmul.f32 %v1587, %v1580
  %v1598 = vmul.f32 %v1587, %v1581
  %v1599 = vmul.f32 %v1587, %v1582
  %v1600 = vmul.f32 %v1587, %v1583
  %v1601 = vmul.f32 %v1587, %v1584
  %v1602 = vmul.f32 %v1587, %v1585
  %v1603 = vmul.f32 %v1587, %v1586
  %v1604 = vld [vmem:[%s1 + $0x41c] sm:$0x1]
  %v1605 = vperm.slane %v1604, 0
  %v1606 = vadd.f32 %v1588, %v1605
  %v1607 = vadd.f32 %v1589, %v1605
  %v1608 = vadd.f32 %v1590, %v1605
  %v1609 = vadd.f32 %v1591, %v1605
  %v1610 = vadd.f32 %v1592, %v1605
  %v1611 = vadd.f32 %v1593, %v1605
  %v1612 = vadd.f32 %v1594, %v1605
  %v1613 = vadd.f32 %v1595, %v1605
  %v1614 = vadd.f32 %v1596, %v1605
  %v1615 = vadd.f32 %v1597, %v1605
  %v1616 = vadd.f32 %v1598, %v1605
  %v1617 = vadd.f32 %v1599, %v1605
  %v1618 = vadd.f32 %v1600, %v1605
  %v1619 = vadd.f32 %v1601, %v1605
  %v1620 = vadd.f32 %v1602, %v1605
  %v1621 = vadd.f32 %v1603, %v1605
  %vm1622 = vcmp.gt.f32.partialorder %v1606, 0.0
  %vm1623 = vcmp.gt.f32.partialorder %v1607, 0.0
  %vm1624 = vcmp.gt.f32.partialorder %v1608, 0.0
  %vm1625 = vcmp.gt.f32.partialorder %v1609, 0.0
  %vm1626 = vcmp.gt.f32.partialorder %v1610, 0.0
  %vm1627 = vcmp.gt.f32.partialorder %v1611, 0.0
  %vm1628 = vcmp.gt.f32.partialorder %v1612, 0.0
  %vm1629 = vcmp.gt.f32.partialorder %v1613, 0.0
  %vm1630 = vcmp.gt.f32.partialorder %v1614, 0.0
  %vm1631 = vcmp.gt.f32.partialorder %v1615, 0.0
  %vm1632 = vcmp.gt.f32.partialorder %v1616, 0.0
  %vm1633 = vcmp.gt.f32.partialorder %v1617, 0.0
  %vm1634 = vcmp.gt.f32.partialorder %v1618, 0.0
  %vm1635 = vcmp.gt.f32.partialorder %v1619, 0.0
  %vm1636 = vcmp.gt.f32.partialorder %v1620, 0.0
  %vm1637 = vcmp.gt.f32.partialorder %v1621, 0.0
  %v1638 = vmul.f32 %v1606, 0.01
  %v1639 = vmul.f32 %v1607, 0.01
  %v1640 = vmul.f32 %v1608, 0.01
  %v1641 = vmul.f32 %v1609, 0.01
  %v1642 = vmul.f32 %v1610, 0.01
  %v1643 = vmul.f32 %v1611, 0.01
  %v1644 = vmul.f32 %v1612, 0.01
  %v1645 = vmul.f32 %v1613, 0.01
  %v1646 = vmul.f32 %v1614, 0.01
  %v1647 = vmul.f32 %v1615, 0.01
  %v1648 = vmul.f32 %v1616, 0.01
  %v1649 = vmul.f32 %v1617, 0.01
  %v1650 = vmul.f32 %v1618, 0.01
  %v1651 = vmul.f32 %v1619, 0.01
  %v1652 = vmul.f32 %v1620, 0.01
  %v1653 = vmul.f32 %v1621, 0.01
  %v1654 = vsel %vm1622, %v1606, %v1638
  %v1655 = vsel %vm1623, %v1607, %v1639
  %v1656 = vsel %vm1624, %v1608, %v1640
  %v1657 = vsel %vm1625, %v1609, %v1641
  %v1658 = vsel %vm1626, %v1610, %v1642
  %v1659 = vsel %vm1627, %v1611, %v1643
  %v1660 = vsel %vm1628, %v1612, %v1644
  %v1661 = vsel %vm1629, %v1613, %v1645
  %v1662 = vsel %vm1630, %v1614, %v1646
  %v1663 = vsel %vm1631, %v1615, %v1647
  %v1664 = vsel %vm1632, %v1616, %v1648
  %v1665 = vsel %vm1633, %v1617, %v1649
  %v1666 = vsel %vm1634, %v1618, %v1650
  %v1667 = vsel %vm1635, %v1619, %v1651
  %v1668 = vsel %vm1636, %v1620, %v1652
  %v1669 = vsel %vm1637, %v1621, %v1653
  %v1670 = vld [vmem:[%s1 + $0x290] sm:$0xff]
  %v1671 = vld [vmem:[%s1 + $0x298] sm:$0xff]
  %v1672 = vld [vmem:[%s1 + $0x2a0] sm:$0xff]
  %v1673 = vld [vmem:[%s1 + $0x2a8] sm:$0xff]
  %v1674 = vld [vmem:[%s1 + $0x2b0] sm:$0xff]
  %v1675 = vld [vmem:[%s1 + $0x2b8] sm:$0xff]
  %v1676 = vld [vmem:[%s1 + $0x2c0] sm:$0xff]
  %v1677 = vld [vmem:[%s1 + $0x2c8] sm:$0xff]
  %v1678 = vld [vmem:[%s1 + $0x2d0] sm:$0xff]
  %v1679 = vld [vmem:[%s1 + $0x2d8] sm:$0xff]
  %v1680 = vld [vmem:[%s1 + $0x2e0] sm:$0xff]
  %v1681 = vld [vmem:[%s1 + $0x2e8] sm:$0xff]
  %v1682 = vld [vmem:[%s1 + $0x2f0] sm:$0xff]
  %v1683 = vld [vmem:[%s1 + $0x2f8] sm:$0xff]
  %v1684 = vld [vmem:[%s1 + $0x300] sm:$0xff]
  %v1685 = vld [vmem:[%s1 + $0x308] sm:$0xff]
  %v1686 = vld [vmem:[%s1 + $0x41d] sm:$0x1]
  %v1687 = vperm.slane %v1686, 0
  %1688 = vmatpush.msra.mxu0 %v1685
  %1689 = vmatpush.msra.mxu0 %v1684
  %1690 = vmatpush.msra.mxu0 %v1683
  %1691 = vmatpush.msra.mxu0 %v1682
  %1692 = vmatpush.msra.mxu0 %v1681
  %1693 = vmatpush.msra.mxu0 %v1680
  %1694 = vmatpush.msra.mxu0 %v1679
  %1695 = vmatpush.msra.mxu0 %v1678
  %1696 = vmatpush.msra.mxu0 %v1677
  %1697 = vmatpush.msra.mxu0 %v1676
  %1698 = vmatpush.msra.mxu0 %v1675
  %1699 = vmatpush.msra.mxu0 %v1674
  %1700 = vmatpush.msra.mxu0 %v1673
  %1701 = vmatpush.msra.mxu0 %v1672
  %1702 = vmatpush.msra.mxu0 %v1671
  %1703 = vmatpush.msra.mxu0 %v1670
  %1704 = vmatmul.f32.gmra.mxu0 %v1654
  %v1705 = vpop.f32.mrf.mxu0
  %v1706 = vadd.f32 %v1687, %v1705
  %1707 = vmatmul.f32.gmra.mxu0 %v1655
  %v1708 = vpop.f32.mrf.mxu0
  %v1709 = vadd.f32 %v1687, %v1708
  %1710 = vmatmul.f32.gmra.mxu0 %v1656
  %v1711 = vpop.f32.mrf.mxu0
  %v1712 = vadd.f32 %v1687, %v1711
  %1713 = vmatmul.f32.gmra.mxu0 %v1657
  %v1714 = vpop.f32.mrf.mxu0
  %v1715 = vadd.f32 %v1687, %v1714
  %1716 = vmatmul.f32.gmra.mxu0 %v1658
  %v1717 = vpop.f32.mrf.mxu0
  %v1718 = vadd.f32 %v1687, %v1717
  %1719 = vmatmul.f32.gmra.mxu0 %v1659
  %v1720 = vpop.f32.mrf.mxu0
  %v1721 = vadd.f32 %v1687, %v1720
  %1722 = vmatmul.f32.gmra.mxu0 %v1660
  %v1723 = vpop.f32.mrf.mxu0
  %v1724 = vadd.f32 %v1687, %v1723
  %1725 = vmatmul.f32.gmra.mxu0 %v1661
  %v1726 = vpop.f32.mrf.mxu0
  %v1727 = vadd.f32 %v1687, %v1726
  %1728 = vmatmul.f32.gmra.mxu0 %v1662
  %v1729 = vpop.f32.mrf.mxu0
  %v1730 = vadd.f32 %v1687, %v1729
  %1731 = vmatmul.f32.gmra.mxu0 %v1663
  %v1732 = vpop.f32.mrf.mxu0
  %v1733 = vadd.f32 %v1687, %v1732
  %1734 = vmatmul.f32.gmra.mxu0 %v1664
  %v1735 = vpop.f32.mrf.mxu0
  %v1736 = vadd.f32 %v1687, %v1735
  %1737 = vmatmul.f32.gmra.mxu0 %v1665
  %v1738 = vpop.f32.mrf.mxu0
  %v1739 = vadd.f32 %v1687, %v1738
  %1740 = vmatmul.f32.gmra.mxu0 %v1666
  %v1741 = vpop.f32.mrf.mxu0
  %v1742 = vadd.f32 %v1687, %v1741
  %1743 = vmatmul.f32.gmra.mxu0 %v1667
  %v1744 = vpop.f32.mrf.mxu0
  %v1745 = vadd.f32 %v1687, %v1744
  %1746 = vmatmul.f32.gmra.mxu0 %v1668
  %v1747 = vpop.f32.mrf.mxu0
  %v1748 = vadd.f32 %v1687, %v1747
  %1749 = vmatmul.f32.gmra.mxu0 %v1669
  %v1750 = vpop.f32.mrf.mxu0
  %v1751 = vadd.f32 %v1687, %v1750
  %1752 = vdwg.mxu0
  %v1753 = vadd.f32 %v1706, %v1709
  %v1754 = vadd.f32 %v1753, %v1712
  %v1755 = vadd.f32 %v1754, %v1715
  %v1756 = vadd.f32 %v1755, %v1718
  %v1757 = vadd.f32 %v1756, %v1721
  %v1758 = vadd.f32 %v1757, %v1724
  %v1759 = vadd.f32 %v1758, %v1727
  %v1760 = vadd.f32 %v1759, %v1730
  %v1761 = vadd.f32 %v1760, %v1733
  %v1762 = vadd.f32 %v1761, %v1736
  %v1763 = vadd.f32 %v1762, %v1739
  %v1764 = vadd.f32 %v1763, %v1742
  %v1765 = vadd.f32 %v1764, %v1745
  %v1766 = vadd.f32 %v1765, %v1748
  %v1767 = vadd.f32 %v1766, %v1751
  %v1768 = vrot.slane %v1767, 4
  %v1769 = vadd.f32 %v1767, %v1768
  %v1770 = vrot.slane %v1769, 2
  %v1771 = vadd.f32 %v1769, %v1770
  %v1772 = vrot.slane %v1771, 1
  %v1773 = vadd.f32 %v1771, %v1772
  %v1774 = vmul.f32 %v1773, 0.0078125
  %v1775 = vmul.f32 %v1706, %v1706
  %v1776 = vmul.f32 %v1709, %v1709
  %v1777 = vmul.f32 %v1712, %v1712
  %v1778 = vmul.f32 %v1715, %v1715
  %v1779 = vmul.f32 %v1718, %v1718
  %v1780 = vmul.f32 %v1721, %v1721
  %v1781 = vmul.f32 %v1724, %v1724
  %v1782 = vmul.f32 %v1727, %v1727
  %v1783 = vmul.f32 %v1730, %v1730
  %v1784 = vmul.f32 %v1733, %v1733
  %v1785 = vmul.f32 %v1736, %v1736
  %v1786 = vmul.f32 %v1739, %v1739
  %v1787 = vmul.f32 %v1742, %v1742
  %v1788 = vmul.f32 %v1745, %v1745
  %v1789 = vmul.f32 %v1748, %v1748
  %v1790 = vmul.f32 %v1751, %v1751
  %v1791 = vadd.f32 %v1775, %v1776
  %v1792 = vadd.f32 %v1791, %v1777
  %v1793 = vadd.f32 %v1792, %v1778
  %v1794 = vadd.f32 %v1793, %v1779
  %v1795 = vadd.f32 %v1794, %v1780
  %v1796 = vadd.f32 %v1795, %v1781
  %v1797 = vadd.f32 %v1796, %v1782
  %v1798 = vadd.f32 %v1797, %v1783
  %v1799 = vadd.f32 %v1798, %v1784
  %v1800 = vadd.f32 %v1799, %v1785
  %v1801 = vadd.f32 %v1800, %v1786
  %v1802 = vadd.f32 %v1801, %v1787
  %v1803 = vadd.f32 %v1802, %v1788
  %v1804 = vadd.f32 %v1803, %v1789
  %v1805 = vadd.f32 %v1804, %v1790
  %v1806 = vrot.slane %v1805, 4
  %v1807 = vadd.f32 %v1805, %v1806
  %v1808 = vrot.slane %v1807, 2
  %v1809 = vadd.f32 %v1807, %v1808
  %v1810 = vrot.slane %v1809, 1
  %v1811 = vadd.f32 %v1809, %v1810
  %v1812 = vmul.f32 %v1811, 0.0078125
  %v1813 = vmul.f32 %v1774, %v1774
  %v1814 = vsub.f32 %v1812, %v1813
  %v1815 = vmax.f32 %v1814, 0.0
  %v1816 = vld [vmem:[%s1 + $0x41e] sm:$0x1]
  %v1817 = vsub.f32 %v1706, %v1774
  %v1818 = vsub.f32 %v1709, %v1774
  %v1819 = vsub.f32 %v1712, %v1774
  %v1820 = vsub.f32 %v1715, %v1774
  %v1821 = vsub.f32 %v1718, %v1774
  %v1822 = vsub.f32 %v1721, %v1774
  %v1823 = vsub.f32 %v1724, %v1774
  %v1824 = vsub.f32 %v1727, %v1774
  %v1825 = vsub.f32 %v1730, %v1774
  %v1826 = vsub.f32 %v1733, %v1774
  %v1827 = vsub.f32 %v1736, %v1774
  %v1828 = vsub.f32 %v1739, %v1774
  %v1829 = vsub.f32 %v1742, %v1774
  %v1830 = vsub.f32 %v1745, %v1774
  %v1831 = vsub.f32 %v1748, %v1774
  %v1832 = vsub.f32 %v1751, %v1774
  %v1833 = vadd.f32 %v1815, 1e-05
  %v1834 = vrsqrt.pop %v1833
  %v1835 = vmul.f32 %v1834, %v1833
  %v1836 = vmul.f32 %v1835, %v1834
  %v1837 = vmul.f32 0.5, %v1836
  %v1838 = vsub.f32 1.5, %v1837
  %v1839 = vmul.f32 %v1834, %v1838
  %vm1840 = vweird.f32 %v1833
  %vm1841 = vweird.f32 %v1834
  %vm1842 = vmor %vm1840, %vm1841
  %v1843 = vsel %vm1842, %v1834, %v1839
  %v1844 = vmul.f32 %v1817, %v1843
  %v1845 = vmul.f32 %v1818, %v1843
  %v1846 = vmul.f32 %v1819, %v1843
  %v1847 = vmul.f32 %v1820, %v1843
  %v1848 = vmul.f32 %v1821, %v1843
  %v1849 = vmul.f32 %v1822, %v1843
  %v1850 = vmul.f32 %v1823, %v1843
  %v1851 = vmul.f32 %v1824, %v1843
  %v1852 = vmul.f32 %v1825, %v1843
  %v1853 = vmul.f32 %v1826, %v1843
  %v1854 = vmul.f32 %v1827, %v1843
  %v1855 = vmul.f32 %v1828, %v1843
  %v1856 = vmul.f32 %v1829, %v1843
  %v1857 = vmul.f32 %v1830, %v1843
  %v1858 = vmul.f32 %v1831, %v1843
  %v1859 = vmul.f32 %v1832, %v1843
  %v1860 = vperm.slane %v1816, 0
  %v1861 = vmul.f32 %v1860, %v1844
  %v1862 = vmul.f32 %v1860, %v1845
  %v1863 = vmul.f32 %v1860, %v1846
  %v1864 = vmul.f32 %v1860, %v1847
  %v1865 = vmul.f32 %v1860, %v1848
  %v1866 = vmul.f32 %v1860, %v1849
  %v1867 = vmul.f32 %v1860, %v1850
  %v1868 = vmul.f32 %v1860, %v1851
  %v1869 = vmul.f32 %v1860, %v1852
  %v1870 = vmul.f32 %v1860, %v1853
  %v1871 = vmul.f32 %v1860, %v1854
  %v1872 = vmul.f32 %v1860, %v1855
  %v1873 = vmul.f32 %v1860, %v1856
  %v1874 = vmul.f32 %v1860, %v1857
  %v1875 = vmul.f32 %v1860, %v1858
  %v1876 = vmul.f32 %v1860, %v1859
  %v1877 = vld [vmem:[%s1 + $0x41f] sm:$0x1]
  %v1878 = vperm.slane %v1877, 0
  %v1879 = vadd.f32 %v1861, %v1878
  %v1880 = vadd.f32 %v1862, %v1878
  %v1881 = vadd.f32 %v1863, %v1878
  %v1882 = vadd.f32 %v1864, %v1878
  %v1883 = vadd.f32 %v1865, %v1878
  %v1884 = vadd.f32 %v1866, %v1878
  %v1885 = vadd.f32 %v1867, %v1878
  %v1886 = vadd.f32 %v1868, %v1878
  %v1887 = vadd.f32 %v1869, %v1878
  %v1888 = vadd.f32 %v1870, %v1878
  %v1889 = vadd.f32 %v1871, %v1878
  %v1890 = vadd.f32 %v1872, %v1878
  %v1891 = vadd.f32 %v1873, %v1878
  %v1892 = vadd.f32 %v1874, %v1878
  %v1893 = vadd.f32 %v1875, %v1878
  %v1894 = vadd.f32 %v1876, %v1878
  %vm1895 = vcmp.gt.f32.partialorder %v1879, 0.0
  %vm1896 = vcmp.gt.f32.partialorder %v1880, 0.0
  %vm1897 = vcmp.gt.f32.partialorder %v1881, 0.0
  %vm1898 = vcmp.gt.f32.partialorder %v1882, 0.0
  %vm1899 = vcmp.gt.f32.partialorder %v1883, 0.0
  %vm1900 = vcmp.gt.f32.partialorder %v1884, 0.0
  %vm1901 = vcmp.gt.f32.partialorder %v1885, 0.0
  %vm1902 = vcmp.gt.f32.partialorder %v1886, 0.0
  %vm1903 = vcmp.gt.f32.partialorder %v1887, 0.0
  %vm1904 = vcmp.gt.f32.partialorder %v1888, 0.0
  %vm1905 = vcmp.gt.f32.partialorder %v1889, 0.0
  %vm1906 = vcmp.gt.f32.partialorder %v1890, 0.0
  %vm1907 = vcmp.gt.f32.partialorder %v1891, 0.0
  %vm1908 = vcmp.gt.f32.partialorder %v1892, 0.0
  %vm1909 = vcmp.gt.f32.partialorder %v1893, 0.0
  %vm1910 = vcmp.gt.f32.partialorder %v1894, 0.0
  %v1911 = vmul.f32 %v1879, 0.01
  %v1912 = vmul.f32 %v1880, 0.01
  %v1913 = vmul.f32 %v1881, 0.01
  %v1914 = vmul.f32 %v1882, 0.01
  %v1915 = vmul.f32 %v1883, 0.01
  %v1916 = vmul.f32 %v1884, 0.01
  %v1917 = vmul.f32 %v1885, 0.01
  %v1918 = vmul.f32 %v1886, 0.01
  %v1919 = vmul.f32 %v1887, 0.01
  %v1920 = vmul.f32 %v1888, 0.01
  %v1921 = vmul.f32 %v1889, 0.01
  %v1922 = vmul.f32 %v1890, 0.01
  %v1923 = vmul.f32 %v1891, 0.01
  %v1924 = vmul.f32 %v1892, 0.01
  %v1925 = vmul.f32 %v1893, 0.01
  %v1926 = vmul.f32 %v1894, 0.01
  %v1927 = vsel %vm1895, %v1879, %v1911
  %v1928 = vsel %vm1896, %v1880, %v1912
  %v1929 = vsel %vm1897, %v1881, %v1913
  %v1930 = vsel %vm1898, %v1882, %v1914
  %v1931 = vsel %vm1899, %v1883, %v1915
  %v1932 = vsel %vm1900, %v1884, %v1916
  %v1933 = vsel %vm1901, %v1885, %v1917
  %v1934 = vsel %vm1902, %v1886, %v1918
  %v1935 = vsel %vm1903, %v1887, %v1919
  %v1936 = vsel %vm1904, %v1888, %v1920
  %v1937 = vsel %vm1905, %v1889, %v1921
  %v1938 = vsel %vm1906, %v1890, %v1922
  %v1939 = vsel %vm1907, %v1891, %v1923
  %v1940 = vsel %vm1908, %v1892, %v1924
  %v1941 = vsel %vm1909, %v1893, %v1925
  %v1942 = vsel %vm1910, %v1894, %v1926
  %v1943 = vld [vmem:[%s1 + $0x310] sm:$0xff]
  %v1944 = vld [vmem:[%s1 + $0x318] sm:$0xff]
  %v1945 = vld [vmem:[%s1 + $0x320] sm:$0xff]
  %v1946 = vld [vmem:[%s1 + $0x328] sm:$0xff]
  %v1947 = vld [vmem:[%s1 + $0x330] sm:$0xff]
  %v1948 = vld [vmem:[%s1 + $0x338] sm:$0xff]
  %v1949 = vld [vmem:[%s1 + $0x340] sm:$0xff]
  %v1950 = vld [vmem:[%s1 + $0x348] sm:$0xff]
  %v1951 = vld [vmem:[%s1 + $0x350] sm:$0xff]
  %v1952 = vld [vmem:[%s1 + $0x358] sm:$0xff]
  %v1953 = vld [vmem:[%s1 + $0x360] sm:$0xff]
  %v1954 = vld [vmem:[%s1 + $0x368] sm:$0xff]
  %v1955 = vld [vmem:[%s1 + $0x370] sm:$0xff]
  %v1956 = vld [vmem:[%s1 + $0x378] sm:$0xff]
  %v1957 = vld [vmem:[%s1 + $0x380] sm:$0xff]
  %v1958 = vld [vmem:[%s1 + $0x388] sm:$0xff]
  %v1959 = vld [vmem:[%s1 + $0x420] sm:$0x1]
  %v1960 = vperm.slane %v1959, 0
  %1961 = vmatpush.msra.mxu0 %v1958
  %1962 = vmatpush.msra.mxu0 %v1957
  %1963 = vmatpush.msra.mxu0 %v1956
  %1964 = vmatpush.msra.mxu0 %v1955
  %1965 = vmatpush.msra.mxu0 %v1954
  %1966 = vmatpush.msra.mxu0 %v1953
  %1967 = vmatpush.msra.mxu0 %v1952
  %1968 = vmatpush.msra.mxu0 %v1951
  %1969 = vmatpush.msra.mxu0 %v1950
  %1970 = vmatpush.msra.mxu0 %v1949
  %1971 = vmatpush.msra.mxu0 %v1948
  %1972 = vmatpush.msra.mxu0 %v1947
  %1973 = vmatpush.msra.mxu0 %v1946
  %1974 = vmatpush.msra.mxu0 %v1945
  %1975 = vmatpush.msra.mxu0 %v1944
  %1976 = vmatpush.msra.mxu0 %v1943
  %1977 = vmatmul.f32.gmra.mxu0 %v1927
  %v1978 = vpop.f32.mrf.mxu0
  %v1979 = vadd.f32 %v1960, %v1978
  %1980 = vmatmul.f32.gmra.mxu0 %v1928
  %v1981 = vpop.f32.mrf.mxu0
  %v1982 = vadd.f32 %v1960, %v1981
  %1983 = vmatmul.f32.gmra.mxu0 %v1929
  %v1984 = vpop.f32.mrf.mxu0
  %v1985 = vadd.f32 %v1960, %v1984
  %1986 = vmatmul.f32.gmra.mxu0 %v1930
  %v1987 = vpop.f32.mrf.mxu0
  %v1988 = vadd.f32 %v1960, %v1987
  %1989 = vmatmul.f32.gmra.mxu0 %v1931
  %v1990 = vpop.f32.mrf.mxu0
  %v1991 = vadd.f32 %v1960, %v1990
  %1992 = vmatmul.f32.gmra.mxu0 %v1932
  %v1993 = vpop.f32.mrf.mxu0
  %v1994 = vadd.f32 %v1960, %v1993
  %1995 = vmatmul.f32.gmra.mxu0 %v1933
  %v1996 = vpop.f32.mrf.mxu0
  %v1997 = vadd.f32 %v1960, %v1996
  %1998 = vmatmul.f32.gmra.mxu0 %v1934
  %v1999 = vpop.f32.mrf.mxu0
  %v2000 = vadd.f32 %v1960, %v1999
  %2001 = vmatmul.f32.gmra.mxu0 %v1935
  %v2002 = vpop.f32.mrf.mxu0
  %v2003 = vadd.f32 %v1960, %v2002
  %2004 = vmatmul.f32.gmra.mxu0 %v1936
  %v2005 = vpop.f32.mrf.mxu0
  %v2006 = vadd.f32 %v1960, %v2005
  %2007 = vmatmul.f32.gmra.mxu0 %v1937
  %v2008 = vpop.f32.mrf.mxu0
  %v2009 = vadd.f32 %v1960, %v2008
  %2010 = vmatmul.f32.gmra.mxu0 %v1938
  %v2011 = vpop.f32.mrf.mxu0
  %v2012 = vadd.f32 %v1960, %v2011
  %2013 = vmatmul.f32.gmra.mxu0 %v1939
  %v2014 = vpop.f32.mrf.mxu0
  %v2015 = vadd.f32 %v1960, %v2014
  %2016 = vmatmul.f32.gmra.mxu0 %v1940
  %v2017 = vpop.f32.mrf.mxu0
  %v2018 = vadd.f32 %v1960, %v2017
  %2019 = vmatmul.f32.gmra.mxu0 %v1941
  %v2020 = vpop.f32.mrf.mxu0
  %v2021 = vadd.f32 %v1960, %v2020
  %2022 = vmatmul.f32.gmra.mxu0 %v1942
  %v2023 = vpop.f32.mrf.mxu0
  %v2024 = vadd.f32 %v1960, %v2023
  %2025 = vdwg.mxu0
  %v2026 = vadd.f32 %v1979, %v1982
  %v2027 = vadd.f32 %v2026, %v1985
  %v2028 = vadd.f32 %v2027, %v1988
  %v2029 = vadd.f32 %v2028, %v1991
  %v2030 = vadd.f32 %v2029, %v1994
  %v2031 = vadd.f32 %v2030, %v1997
  %v2032 = vadd.f32 %v2031, %v2000
  %v2033 = vadd.f32 %v2032, %v2003
  %v2034 = vadd.f32 %v2033, %v2006
  %v2035 = vadd.f32 %v2034, %v2009
  %v2036 = vadd.f32 %v2035, %v2012
  %v2037 = vadd.f32 %v2036, %v2015
  %v2038 = vadd.f32 %v2037, %v2018
  %v2039 = vadd.f32 %v2038, %v2021
  %v2040 = vadd.f32 %v2039, %v2024
  %v2041 = vrot.slane %v2040, 4
  %v2042 = vadd.f32 %v2040, %v2041
  %v2043 = vrot.slane %v2042, 2
  %v2044 = vadd.f32 %v2042, %v2043
  %v2045 = vrot.slane %v2044, 1
  %v2046 = vadd.f32 %v2044, %v2045
  %v2047 = vmul.f32 %v2046, 0.0078125
  %v2048 = vmul.f32 %v1979, %v1979
  %v2049 = vmul.f32 %v1982, %v1982
  %v2050 = vmul.f32 %v1985, %v1985
  %v2051 = vmul.f32 %v1988, %v1988
  %v2052 = vmul.f32 %v1991, %v1991
  %v2053 = vmul.f32 %v1994, %v1994
  %v2054 = vmul.f32 %v1997, %v1997
  %v2055 = vmul.f32 %v2000, %v2000
  %v2056 = vmul.f32 %v2003, %v2003
  %v2057 = vmul.f32 %v2006, %v2006
  %v2058 = vmul.f32 %v2009, %v2009
  %v2059 = vmul.f32 %v2012, %v2012
  %v2060 = vmul.f32 %v2015, %v2015
  %v2061 = vmul.f32 %v2018, %v2018
  %v2062 = vmul.f32 %v2021, %v2021
  %v2063 = vmul.f32 %v2024, %v2024
  %v2064 = vadd.f32 %v2048, %v2049
  %v2065 = vadd.f32 %v2064, %v2050
  %v2066 = vadd.f32 %v2065, %v2051
  %v2067 = vadd.f32 %v2066, %v2052
  %v2068 = vadd.f32 %v2067, %v2053
  %v2069 = vadd.f32 %v2068, %v2054
  %v2070 = vadd.f32 %v2069, %v2055
  %v2071 = vadd.f32 %v2070, %v2056
  %v2072 = vadd.f32 %v2071, %v2057
  %v2073 = vadd.f32 %v2072, %v2058
  %v2074 = vadd.f32 %v2073, %v2059
  %v2075 = vadd.f32 %v2074, %v2060
  %v2076 = vadd.f32 %v2075, %v2061
  %v2077 = vadd.f32 %v2076, %v2062
  %v2078 = vadd.f32 %v2077, %v2063
  %v2079 = vrot.slane %v2078, 4
  %v2080 = vadd.f32 %v2078, %v2079
  %v2081 = vrot.slane %v2080, 2
  %v2082 = vadd.f32 %v2080, %v2081
  %v2083 = vrot.slane %v2082, 1
  %v2084 = vadd.f32 %v2082, %v2083
  %v2085 = vmul.f32 %v2084, 0.0078125
  %v2086 = vmul.f32 %v2047, %v2047
  %v2087 = vsub.f32 %v2085, %v2086
  %v2088 = vmax.f32 %v2087, 0.0
  %v2089 = vld [vmem:[%s1 + $0x421] sm:$0x1]
  %v2090 = vsub.f32 %v1979, %v2047
  %v2091 = vsub.f32 %v1982, %v2047
  %v2092 = vsub.f32 %v1985, %v2047
  %v2093 = vsub.f32 %v1988, %v2047
  %v2094 = vsub.f32 %v1991, %v2047
  %v2095 = vsub.f32 %v1994, %v2047
  %v2096 = vsub.f32 %v1997, %v2047
  %v2097 = vsub.f32 %v2000, %v2047
  %v2098 = vsub.f32 %v2003, %v2047
  %v2099 = vsub.f32 %v2006, %v2047
  %v2100 = vsub.f32 %v2009, %v2047
  %v2101 = vsub.f32 %v2012, %v2047
  %v2102 = vsub.f32 %v2015, %v2047
  %v2103 = vsub.f32 %v2018, %v2047
  %v2104 = vsub.f32 %v2021, %v2047
  %v2105 = vsub.f32 %v2024, %v2047
  %v2106 = vadd.f32 %v2088, 1e-05
  %v2107 = vrsqrt.pop %v2106
  %v2108 = vmul.f32 %v2107, %v2106
  %v2109 = vmul.f32 %v2108, %v2107
  %v2110 = vmul.f32 0.5, %v2109
  %v2111 = vsub.f32 1.5, %v2110
  %v2112 = vmul.f32 %v2107, %v2111
  %vm2113 = vweird.f32 %v2106
  %vm2114 = vweird.f32 %v2107
  %vm2115 = vmor %vm2113, %vm2114
  %v2116 = vsel %vm2115, %v2107, %v2112
  %v2117 = vmul.f32 %v2090, %v2116
  %v2118 = vmul.f32 %v2091, %v2116
  %v2119 = vmul.f32 %v2092, %v2116
  %v2120 = vmul.f32 %v2093, %v2116
  %v2121 = vmul.f32 %v2094, %v2116
  %v2122 = vmul.f32 %v2095, %v2116
  %v2123 = vmul.f32 %v2096, %v2116
  %v2124 = vmul.f32 %v2097, %v2116
  %v2125 = vmul.f32 %v2098, %v2116
  %v2126 = vmul.f32 %v2099, %v2116
  %v2127 = vmul.f32 %v2100, %v2116
  %v2128 = vmul.f32 %v2101, %v2116
  %v2129 = vmul.f32 %v2102, %v2116
  %v2130 = vmul.f32 %v2103, %v2116
  %v2131 = vmul.f32 %v2104, %v2116
  %v2132 = vmul.f32 %v2105, %v2116
  %v2133 = vperm.slane %v2089, 0
  %v2134 = vmul.f32 %v2133, %v2117
  %v2135 = vmul.f32 %v2133, %v2118
  %v2136 = vmul.f32 %v2133, %v2119
  %v2137 = vmul.f32 %v2133, %v2120
  %v2138 = vmul.f32 %v2133, %v2121
  %v2139 = vmul.f32 %v2133, %v2122
  %v2140 = vmul.f32 %v2133, %v2123
  %v2141 = vmul.f32 %v2133, %v2124
  %v2142 = vmul.f32 %v2133, %v2125
  %v2143 = vmul.f32 %v2133, %v2126
  %v2144 = vmul.f32 %v2133, %v2127
  %v2145 = vmul.f32 %v2133, %v2128
  %v2146 = vmul.f32 %v2133, %v2129
  %v2147 = vmul.f32 %v2133, %v2130
  %v2148 = vmul.f32 %v2133, %v2131
  %v2149 = vmul.f32 %v2133, %v2132
  %v2150 = vld [vmem:[%s1 + $0x422] sm:$0x1]
  %v2151 = vperm.slane %v2150, 0
  %v2152 = vadd.f32 %v2134, %v2151
  %v2153 = vadd.f32 %v2135, %v2151
  %v2154 = vadd.f32 %v2136, %v2151
  %v2155 = vadd.f32 %v2137, %v2151
  %v2156 = vadd.f32 %v2138, %v2151
  %v2157 = vadd.f32 %v2139, %v2151
  %v2158 = vadd.f32 %v2140, %v2151
  %v2159 = vadd.f32 %v2141, %v2151
  %v2160 = vadd.f32 %v2142, %v2151
  %v2161 = vadd.f32 %v2143, %v2151
  %v2162 = vadd.f32 %v2144, %v2151
  %v2163 = vadd.f32 %v2145, %v2151
  %v2164 = vadd.f32 %v2146, %v2151
  %v2165 = vadd.f32 %v2147, %v2151
  %v2166 = vadd.f32 %v2148, %v2151
  %v2167 = vadd.f32 %v2149, %v2151
  %vm2168 = vcmp.gt.f32.partialorder %v2152, 0.0
  %vm2169 = vcmp.gt.f32.partialorder %v2153, 0.0
  %vm2170 = vcmp.gt.f32.partialorder %v2154, 0.0
  %vm2171 = vcmp.gt.f32.partialorder %v2155, 0.0
  %vm2172 = vcmp.gt.f32.partialorder %v2156, 0.0
  %vm2173 = vcmp.gt.f32.partialorder %v2157, 0.0
  %vm2174 = vcmp.gt.f32.partialorder %v2158, 0.0
  %vm2175 = vcmp.gt.f32.partialorder %v2159, 0.0
  %vm2176 = vcmp.gt.f32.partialorder %v2160, 0.0
  %vm2177 = vcmp.gt.f32.partialorder %v2161, 0.0
  %vm2178 = vcmp.gt.f32.partialorder %v2162, 0.0
  %vm2179 = vcmp.gt.f32.partialorder %v2163, 0.0
  %vm2180 = vcmp.gt.f32.partialorder %v2164, 0.0
  %vm2181 = vcmp.gt.f32.partialorder %v2165, 0.0
  %vm2182 = vcmp.gt.f32.partialorder %v2166, 0.0
  %vm2183 = vcmp.gt.f32.partialorder %v2167, 0.0
  %v2184 = vmul.f32 %v2152, 0.01
  %v2185 = vmul.f32 %v2153, 0.01
  %v2186 = vmul.f32 %v2154, 0.01
  %v2187 = vmul.f32 %v2155, 0.01
  %v2188 = vmul.f32 %v2156, 0.01
  %v2189 = vmul.f32 %v2157, 0.01
  %v2190 = vmul.f32 %v2158, 0.01
  %v2191 = vmul.f32 %v2159, 0.01
  %v2192 = vmul.f32 %v2160, 0.01
  %v2193 = vmul.f32 %v2161, 0.01
  %v2194 = vmul.f32 %v2162, 0.01
  %v2195 = vmul.f32 %v2163, 0.01
  %v2196 = vmul.f32 %v2164, 0.01
  %v2197 = vmul.f32 %v2165, 0.01
  %v2198 = vmul.f32 %v2166, 0.01
  %v2199 = vmul.f32 %v2167, 0.01
  %v2200 = vsel %vm2168, %v2152, %v2184
  %v2201 = vsel %vm2169, %v2153, %v2185
  %v2202 = vsel %vm2170, %v2154, %v2186
  %v2203 = vsel %vm2171, %v2155, %v2187
  %v2204 = vsel %vm2172, %v2156, %v2188
  %v2205 = vsel %vm2173, %v2157, %v2189
  %v2206 = vsel %vm2174, %v2158, %v2190
  %v2207 = vsel %vm2175, %v2159, %v2191
  %v2208 = vsel %vm2176, %v2160, %v2192
  %v2209 = vsel %vm2177, %v2161, %v2193
  %v2210 = vsel %vm2178, %v2162, %v2194
  %v2211 = vsel %vm2179, %v2163, %v2195
  %v2212 = vsel %vm2180, %v2164, %v2196
  %v2213 = vsel %vm2181, %v2165, %v2197
  %v2214 = vsel %vm2182, %v2166, %v2198
  %v2215 = vsel %vm2183, %v2167, %v2199
  %v2216 = vld [vmem:[%s1 + $0x390] sm:$0xff]
  %v2217 = vld [vmem:[%s1 + $0x398] sm:$0xff]
  %v2218 = vld [vmem:[%s1 + $0x3a0] sm:$0xff]
  %v2219 = vld [vmem:[%s1 + $0x3a8] sm:$0xff]
  %v2220 = vld [vmem:[%s1 + $0x3b0] sm:$0xff]
  %v2221 = vld [vmem:[%s1 + $0x3b8] sm:$0xff]
  %v2222 = vld [vmem:[%s1 + $0x3c0] sm:$0xff]
  %v2223 = vld [vmem:[%s1 + $0x3c8] sm:$0xff]
  %v2224 = vld [vmem:[%s1 + $0x3d0] sm:$0xff]
  %v2225 = vld [vmem:[%s1 + $0x3d8] sm:$0xff]
  %v2226 = vld [vmem:[%s1 + $0x3e0] sm:$0xff]
  %v2227 = vld [vmem:[%s1 + $0x3e8] sm:$0xff]
  %v2228 = vld [vmem:[%s1 + $0x3f0] sm:$0xff]
  %v2229 = vld [vmem:[%s1 + $0x3f8] sm:$0xff]
  %v2230 = vld [vmem:[%s1 + $0x400] sm:$0xff]
  %v2231 = vld [vmem:[%s1 + $0x408] sm:$0xff]
  %v2232 = vld [vmem:[%s1 + $0x423] sm:$0x1]
  %v2233 = vperm.slane %v2232, 0
  %2234 = vmatpush.msra.mxu0 %v2231
  %2235 = vmatpush.msra.mxu0 %v2230
  %2236 = vmatpush.msra.mxu0 %v2229
  %2237 = vmatpush.msra.mxu0 %v2228
  %2238 = vmatpush.msra.mxu0 %v2227
  %2239 = vmatpush.msra.mxu0 %v2226
  %2240 = vmatpush.msra.mxu0 %v2225
  %2241 = vmatpush.msra.mxu0 %v2224
  %2242 = vmatpush.msra.mxu0 %v2223
  %2243 = vmatpush.msra.mxu0 %v2222
  %2244 = vmatpush.msra.mxu0 %v2221
  %2245 = vmatpush.msra.mxu0 %v2220
  %2246 = vmatpush.msra.mxu0 %v2219
  %2247 = vmatpush.msra.mxu0 %v2218
  %2248 = vmatpush.msra.mxu0 %v2217
  %2249 = vmatpush.msra.mxu0 %v2216
  %2250 = vmatmul.f32.gmra.mxu0 %v2200
  %v2251 = vpop.f32.mrf.mxu0
  %v2252 = vadd.f32 %v2233, %v2251
  %2253 = vmatmul.f32.gmra.mxu0 %v2201
  %v2254 = vpop.f32.mrf.mxu0
  %v2255 = vadd.f32 %v2233, %v2254
  %2256 = vmatmul.f32.gmra.mxu0 %v2202
  %v2257 = vpop.f32.mrf.mxu0
  %v2258 = vadd.f32 %v2233, %v2257
  %2259 = vmatmul.f32.gmra.mxu0 %v2203
  %v2260 = vpop.f32.mrf.mxu0
  %v2261 = vadd.f32 %v2233, %v2260
  %2262 = vmatmul.f32.gmra.mxu0 %v2204
  %v2263 = vpop.f32.mrf.mxu0
  %v2264 = vadd.f32 %v2233, %v2263
  %2265 = vmatmul.f32.gmra.mxu0 %v2205
  %v2266 = vpop.f32.mrf.mxu0
  %v2267 = vadd.f32 %v2233, %v2266
  %2268 = vmatmul.f32.gmra.mxu0 %v2206
  %v2269 = vpop.f32.mrf.mxu0
  %v2270 = vadd.f32 %v2233, %v2269
  %2271 = vmatmul.f32.gmra.mxu0 %v2207
  %v2272 = vpop.f32.mrf.mxu0
  %v2273 = vadd.f32 %v2233, %v2272
  %2274 = vmatmul.f32.gmra.mxu0 %v2208
  %v2275 = vpop.f32.mrf.mxu0
  %v2276 = vadd.f32 %v2233, %v2275
  %2277 = vmatmul.f32.gmra.mxu0 %v2209
  %v2278 = vpop.f32.mrf.mxu0
  %v2279 = vadd.f32 %v2233, %v2278
  %2280 = vmatmul.f32.gmra.mxu0 %v2210
  %v2281 = vpop.f32.mrf.mxu0
  %v2282 = vadd.f32 %v2233, %v2281
  %2283 = vmatmul.f32.gmra.mxu0 %v2211
  %v2284 = vpop.f32.mrf.mxu0
  %v2285 = vadd.f32 %v2233, %v2284
  %2286 = vmatmul.f32.gmra.mxu0 %v2212
  %v2287 = vpop.f32.mrf.mxu0
  %v2288 = vadd.f32 %v2233, %v2287
  %2289 = vmatmul.f32.gmra.mxu0 %v2213
  %v2290 = vpop.f32.mrf.mxu0
  %v2291 = vadd.f32 %v2233, %v2290
  %2292 = vmatmul.f32.gmra.mxu0 %v2214
  %v2293 = vpop.f32.mrf.mxu0
  %v2294 = vadd.f32 %v2233, %v2293
  %2295 = vmatmul.f32.gmra.mxu0 %v2215
  %v2296 = vpop.f32.mrf.mxu0
  %v2297 = vadd.f32 %v2233, %v2296
  %2298 = vdwg.mxu0
  %2299 = vst [vmem:[%s2] sm:$0xff] %v882
  %2300 = vst [vmem:[%s2 + $0x18] sm:$0xff] %v885
  %2301 = vst [vmem:[%s2 + $0x30] sm:$0xff] %v888
  %2302 = vst [vmem:[%s2 + $0x48] sm:$0xff] %v891
  %2303 = vst [vmem:[%s2 + $0x60] sm:$0xff] %v894
  %2304 = vst [vmem:[%s2 + $0x78] sm:$0xff] %v897
  %2305 = vst [vmem:[%s2 + $0x90] sm:$0xff] %v900
  %2306 = vst [vmem:[%s2 + $0xa8] sm:$0xff] %v903
  %2307 = vst [vmem:[%s2 + $0xc0] sm:$0xff] %v906
  %2308 = vst [vmem:[%s2 + $0xd8] sm:$0xff] %v909
  %2309 = vst [vmem:[%s2 + $0xf0] sm:$0xff] %v912
  %2310 = vst [vmem:[%s2 + $0x108] sm:$0xff] %v915
  %2311 = vst [vmem:[%s2 + $0x120] sm:$0xff] %v918
  %2312 = vst [vmem:[%s2 + $0x138] sm:$0xff] %v921
  %2313 = vst [vmem:[%s2 + $0x150] sm:$0xff] %v924
  %2314 = vst [vmem:[%s2 + $0x168] sm:$0xff] %v927
  %2315 = vst [vmem:[%s2 + $0x8] sm:$0xff] %v2252
  %2316 = vst [vmem:[%s2 + $0x20] sm:$0xff] %v2255
  %2317 = vst [vmem:[%s2 + $0x38] sm:$0xff] %v2258
  %2318 = vst [vmem:[%s2 + $0x50] sm:$0xff] %v2261
  %2319 = vst [vmem:[%s2 + $0x68] sm:$0xff] %v2264
  %2320 = vst [vmem:[%s2 + $0x80] sm:$0xff] %v2267
  %2321 = vst [vmem:[%s2 + $0x98] sm:$0xff] %v2270
  %2322 = vst [vmem:[%s2 + $0xb0] sm:$0xff] %v2273
  %2323 = vst [vmem:[%s2 + $0xc8] sm:$0xff] %v2276
  %2324 = vst [vmem:[%s2 + $0xe0] sm:$0xff] %v2279
  %2325 = vst [vmem:[%s2 + $0xf8] sm:$0xff] %v2282
  %2326 = vst [vmem:[%s2 + $0x110] sm:$0xff] %v2285
  %2327 = vst [vmem:[%s2 + $0x128] sm:$0xff] %v2288
  %2328 = vst [vmem:[%s2 + $0x140] sm:$0xff] %v2291
  %2329 = vst [vmem:[%s2 + $0x158] sm:$0xff] %v2294
  %2330 = vst [vmem:[%s2 + $0x170] sm:$0xff] %v2297
  %vm2331 = vcmask 261120
  %v2332 = vsel %vm2331, %v1009, 0.0
  %v2333 = vsel %vm2331, %v1010, 0.0
  %v2334 = vsel %vm2331, %v1011, 0.0
  %v2335 = vsel %vm2331, %v1012, 0.0
  %v2336 = vsel %vm2331, %v1013, 0.0
  %v2337 = vsel %vm2331, %v1014, 0.0
  %v2338 = vsel %vm2331, %v1015, 0.0
  %v2339 = vsel %vm2331, %v1016, 0.0
  %v2340 = vsel %vm2331, %v1017, 0.0
  %v2341 = vsel %vm2331, %v1018, 0.0
  %v2342 = vsel %vm2331, %v1019, 0.0
  %v2343 = vsel %vm2331, %v1020, 0.0
  %v2344 = vsel %vm2331, %v1021, 0.0
  %v2345 = vsel %vm2331, %v1022, 0.0
  %v2346 = vsel %vm2331, %v1023, 0.0
  %v2347 = vsel %vm2331, %v1024, 0.0
  %2348 = vst [vmem:[%s2 + $0x10] sm:$0xff] %v2332
  %2349 = vst [vmem:[%s2 + $0x28] sm:$0xff] %v2333
  %2350 = vst [vmem:[%s2 + $0x40] sm:$0xff] %v2334
  %2351 = vst [vmem:[%s2 + $0x58] sm:$0xff] %v2335
  %2352 = vst [vmem:[%s2 + $0x70] sm:$0xff] %v2336
  %2353 = vst [vmem:[%s2 + $0x88] sm:$0xff] %v2337
  %2354 = vst [vmem:[%s2 + $0xa0] sm:$0xff] %v2338
  %2355 = vst [vmem:[%s2 + $0xb8] sm:$0xff] %v2339
  %2356 = vst [vmem:[%s2 + $0xd0] sm:$0xff] %v2340
  %2357 = vst [vmem:[%s2 + $0xe8] sm:$0xff] %v2341
  %2358 = vst [vmem:[%s2 + $0x100] sm:$0xff] %v2342
  %2359 = vst [vmem:[%s2 + $0x118] sm:$0xff] %v2343
  %2360 = vst [vmem:[%s2 + $0x130] sm:$0xff] %v2344
  %2361 = vst [vmem:[%s2 + $0x148] sm:$0xff] %v2345
  %2362 = vst [vmem:[%s2 + $0x160] sm:$0xff] %v2346
  %2363 = vst [vmem:[%s2 + $0x178] sm:$0xff] %v2347
  // Predicated region
  $region10: #{forward.1} parent=0 // pred_check
    _
  $region11: #{forward.1} parent=0 // pred_check_branch
    %2365 = sbr.rel (0) target = $region13
  $region12: #{forward.1} parent=0 // pred_region
    _
  $region13: #{forward.1} parent=0 // pred_fallthru
    _
  // Predicated region
  $region14: #{forward.1} parent=0 // pred_check
    _
  $region15: #{forward.1} parent=0 // pred_check_branch
    %2367 = sbr.rel (0) target = $region17
  $region16: #{forward.1} parent=0 // pred_region
    _
  $region17: #{forward.1} parent=0 // pred_fallthru
    _

</llo_original>
